<compile_context>
chip_gen: v7x
topology: tpu7x:2x2x1
jax: 0.10.0
libtpu: 0.0.40
codegen_flags: <defaults>
</compile_context>

<pallas_src>
import functools

import jax
import jax.numpy as jnp
from jax import lax
from jax.experimental import pallas as pl
from jax.experimental.pallas import tpu as pltpu


def _mha_kernel(q_in_ref, k_in_ref, v_in_ref,
                wq_ref, bq_ref, wk_ref, bk_ref, wv_ref, bv_ref,
                wc_ref, bc_ref, g1_ref,
                w0_ref, b0_ref, w1_ref, b1_ref, g2_ref,
                o_ref, *, head_nums, key_size, head_size, scale, eps, d_model):
    f32 = jnp.float32
    qx = q_in_ref[...].astype(f32)        # (Tq, D)   query tile
    kx = k_in_ref[...].astype(f32)        # (Lk, D)   full keys for this batch
    vx = v_in_ref[...].astype(f32)        # (Lk, D)   full values for this batch

    # --- QKV projections: one MXU matmul each, all heads at once ---
    q = jnp.dot(qx, wq_ref[...], preferred_element_type=f32) + bq_ref[...]   # (Tq, H*Dk)
    k = jnp.dot(kx, wk_ref[...], preferred_element_type=f32) + bk_ref[...]   # (Lk, H*Dk)
    v = jnp.dot(vx, wv_ref[...], preferred_element_type=f32) + bv_ref[...]   # (Lk, H*Dv)

    tq = qx.shape[0]
    out_dim = wc_ref.shape[1]

    # --- per-head attention; concat + output projection folded into accumulation ---
    acc = jnp.zeros((tq, out_dim), dtype=f32)
    for h in range(head_nums):                       # static unrolled loop (H is small)
        q_h = q[:, h * key_size:(h + 1) * key_size]          # (Tq, Dk)
        k_h = k[:, h * key_size:(h + 1) * key_size]          # (Lk, Dk)
        v_h = v[:, h * head_size:(h + 1) * head_size]        # (Lk, Dv)

        # scores: contract over the per-head feature dim (== q_h @ k_h^T), no transpose op
        s = lax.dot_general(q_h, k_h, (((1,), (1,)), ((), ())),
                            preferred_element_type=f32) * scale              # (Tq, Lk)
        s = s - jnp.max(s, axis=-1, keepdims=True)
        p = jnp.exp(s)
        p = p / jnp.sum(p, axis=-1, keepdims=True)

        o_h = jnp.dot(p, v_h, preferred_element_type=f32)                    # (Tq, Dv)
        wc_h = wc_ref[h * head_size:(h + 1) * head_size, :]                  # (Dv, Do)
        acc = acc + jnp.dot(o_h, wc_h, preferred_element_type=f32)
    o_proj = acc + bc_ref[...]                                               # (Tq, Do)

    # --- residual + RMSNorm 1 (matches PyTorch: x / (||x||*D^-0.5 + eps) * g) ---
    x = o_proj + qx
    rms = jnp.sqrt(jnp.sum(x * x, axis=-1, keepdims=True)) * (d_model ** -0.5)
    rms1 = g1_ref[...] * (x / (rms + eps))

    # --- MLP: Linear -> ReLU -> Linear ---
    hdn = jnp.maximum(
        jnp.dot(rms1, w0_ref[...], preferred_element_type=f32) + b0_ref[...], 0.0)
    mlp = jnp.dot(hdn, w1_ref[...], preferred_element_type=f32) + b1_ref[...]

    # --- residual + RMSNorm 2 ---
    y = rms1 + mlp
    rms2 = jnp.sqrt(jnp.sum(y * y, axis=-1, keepdims=True)) * (d_model ** -0.5)
    out = g2_ref[...] * (y / (rms2 + eps))

    o_ref[...] = out.astype(o_ref.dtype)


def multi_head_attention_forward(q_in, k_in, v_in, params, *,
                                 head_nums, key_size, head_size, block_q=None):
    """q_in/k_in/v_in: (B, L, d_model) f32.  Returns (B, Lq, out_dim)."""
    B, Lq, D = q_in.shape
    _, Lk, _ = k_in.shape
    assert k_in.shape == (B, Lk, D) and v_in.shape == (B, Lk, D)

    if block_q is None:
        block_q = min(Lq, 128)
    assert Lq % block_q == 0
    num_q_tiles = Lq // block_q

    out_dim = params['wc'].shape[1]
    scale = 1.0 / float(D) ** 0.5          # PyTorch uses 1/sqrt(d_model)
    eps = 1e-8

    kernel = functools.partial(
        _mha_kernel, head_nums=head_nums, key_size=key_size,
        head_size=head_size, scale=scale, eps=eps, d_model=D)

    def resident(arr):
        # Full-extent block, constant index -> DMA'd once, stays VMEM-resident.
        shape = arr.shape
        return pl.BlockSpec(shape, lambda b, qi: (0,) * len(shape))

    weight_order = ('wq', 'bq', 'wk', 'bk', 'wv', 'bv',
                    'wc', 'bc', 'g1', 'w0', 'b0', 'w1', 'b1', 'g2')
    weight_specs = [resident(params[name]) for name in weight_order]

    grid_spec = pltpu.PrefetchScalarGridSpec(
        num_scalar_prefetch=0,
        # batch OUTER, query tiles INNER: K/V (and weights) keep the same block
        # index across the inner axis, so they are not re-fetched per tile.
        grid=(B, num_q_tiles),
        in_specs=[
            pl.BlockSpec((None, block_q, D), lambda b, qi: (b, qi, 0)),   # query tile
            pl.BlockSpec((None, Lk, D), lambda b, qi: (b, 0, 0)),         # full keys
            pl.BlockSpec((None, Lk, D), lambda b, qi: (b, 0, 0)),         # full values
        ] + weight_specs,
        out_specs=pl.BlockSpec((None, block_q, out_dim), lambda b, qi: (b, qi, 0)),
    )

    return pl.pallas_call(
        kernel,
        out_shape=jax.ShapeDtypeStruct((B, Lq, out_dim), q_in.dtype),
        grid_spec=grid_spec,
        compiler_params=pltpu.CompilerParams(
            dimension_semantics=("parallel", "parallel")),
    )(q_in, k_in, v_in, *[params[name] for name in weight_order])


# ----------------------- pure-JAX reference (for checking) -----------------------

def _rmsnorm_ref(x, g, eps=1e-8):
    d = x.shape[-1]
    norm = jnp.sqrt(jnp.sum(x * x, axis=-1, keepdims=True))
    rms = norm * (d ** -0.5)
    return g * (x / (rms + eps))


def reference_forward(qx, kx, vx, p, H, Dk, Dv):
    B, Lq, D = qx.shape
    Lk = kx.shape[1]
    scale = 1.0 / float(D) ** 0.5
    q = (qx @ p['wq'] + p['bq']).reshape(B, Lq, H, Dk)
    k = (kx @ p['wk'] + p['bk']).reshape(B, Lk, H, Dk)
    v = (vx @ p['wv'] + p['bv']).reshape(B, Lk, H, Dv)
    a = jnp.einsum('bnhd,bmhd->bhnm', q, k) * scale
    a = jax.nn.softmax(a, axis=-1)
    o = jnp.einsum('bhnm,bmhd->bnhd', a, v).reshape(B, Lq, H * Dv)
    o = o @ p['wc'] + p['bc']
    rms1 = _rmsnorm_ref(o + qx, p['g1'])
    h = jax.nn.relu(rms1 @ p['w0'] + p['b0'])
    mlp = h @ p['w1'] + p['b1']
    return _rmsnorm_ref(rms1 + mlp, p['g2'])


if __name__ == "__main__":
    # Small shapes consistent with the module: d_model=32, 4 heads of size 8,
    # out_dim = 4*8 = 32 (== d_model, required by the residual), batch=2, seq=8.
    B, L, D = 2, 8, 32
    H, Dk, Dv = 4, 8, 8
    out_dim = H * Dv
    hidden = D // 2

    key = jax.random.PRNGKey(0)
    ks = jax.random.split(key, 16)

    def init(k, shape, s=0.1):
        return jax.random.normal(k, shape, dtype=jnp.float32) * s

    params = dict(
        wq=init(ks[0], (D, H * Dk)), bq=init(ks[1], (1, H * Dk)),
        wk=init(ks[2], (D, H * Dk)), bk=init(ks[3], (1, H * Dk)),
        wv=init(ks[4], (D, H * Dv)), bv=init(ks[5], (1, H * Dv)),
        wc=init(ks[6], (H * Dv, out_dim)), bc=init(ks[7], (1, out_dim)),
        g1=jnp.ones((1, D), jnp.float32),
        w0=init(ks[8], (D, hidden)), b0=init(ks[9], (1, hidden)),
        w1=init(ks[10], (hidden, D)), b1=init(ks[11], (1, D)),
        g2=jnp.ones((1, D), jnp.float32),
    )

    q_in = jax.random.normal(ks[12], (B, L, D), dtype=jnp.float32)
    k_in = jax.random.normal(ks[13], (B, L, D), dtype=jnp.float32)
    v_in = jax.random.normal(ks[14], (B, L, D), dtype=jnp.float32)

    out = multi_head_attention_forward(
        q_in, k_in, v_in, params, head_nums=H, key_size=Dk, head_size=Dv)
    out = jax.block_until_ready(out)

    ref = reference_forward(q_in, k_in, v_in, params, H, Dk, Dv)
    assert out.shape == (B, L, out_dim)
    assert jnp.allclose(out, ref, atol=1e-4, rtol=1e-4), "mismatch vs reference"

    print("KERNEL_OK")
</pallas_src>

<mosaic_0001>
module attributes {stable_mosaic.version = 11 : i64} {
  func.func @_mha_kernel(%arg0: i32, %arg1: i32, %arg2: memref<1x8x32xf32, #tpu.memory_space<vmem>>, %arg3: memref<1x8x32xf32, #tpu.memory_space<vmem>>, %arg4: memref<1x8x32xf32, #tpu.memory_space<vmem>>, %arg5: memref<32x32xf32, #tpu.memory_space<vmem>>, %arg6: memref<1x32xf32, #tpu.memory_space<vmem>>, %arg7: memref<32x32xf32, #tpu.memory_space<vmem>>, %arg8: memref<1x32xf32, #tpu.memory_space<vmem>>, %arg9: memref<32x32xf32, #tpu.memory_space<vmem>>, %arg10: memref<1x32xf32, #tpu.memory_space<vmem>>, %arg11: memref<32x32xf32, #tpu.memory_space<vmem>>, %arg12: memref<1x32xf32, #tpu.memory_space<vmem>>, %arg13: memref<1x32xf32, #tpu.memory_space<vmem>>, %arg14: memref<32x16xf32, #tpu.memory_space<vmem>>, %arg15: memref<1x16xf32, #tpu.memory_space<vmem>>, %arg16: memref<16x32xf32, #tpu.memory_space<vmem>>, %arg17: memref<1x32xf32, #tpu.memory_space<vmem>>, %arg18: memref<1x32xf32, #tpu.memory_space<vmem>>, %arg19: memref<1x8x32xf32, #tpu.memory_space<vmem>>) attributes {dimension_semantics = [#tpu.dimension_semantics<parallel>, #tpu.dimension_semantics<parallel>], iteration_bounds = array<i64: 2, 1>, scalar_prefetch = 0 : i64, scratch_operands = 0 : i64, tpu.core_type = #tpu.core_type<tc>, window_params = [{transform_indices = @transform_0, window_bounds = array<i64: 1, 8, 32>}, {transform_indices = @transform_1, window_bounds = array<i64: 1, 8, 32>}, {transform_indices = @transform_2, window_bounds = array<i64: 1, 8, 32>}, {pipeline_mode = #tpu.pipeline_mode<synchronous>, transform_indices = @transform_3, window_bounds = array<i64: 32, 32>}, {pipeline_mode = #tpu.pipeline_mode<synchronous>, transform_indices = @transform_4, window_bounds = array<i64: 1, 32>}, {pipeline_mode = #tpu.pipeline_mode<synchronous>, transform_indices = @transform_5, window_bounds = array<i64: 32, 32>}, {pipeline_mode = #tpu.pipeline_mode<synchronous>, transform_indices = @transform_6, window_bounds = array<i64: 1, 32>}, {pipeline_mode = #tpu.pipeline_mode<synchronous>, transform_indices = @transform_7, window_bounds = array<i64: 32, 32>}, {pipeline_mode = #tpu.pipeline_mode<synchronous>, transform_indices = @transform_8, window_bounds = array<i64: 1, 32>}, {pipeline_mode = #tpu.pipeline_mode<synchronous>, transform_indices = @transform_9, window_bounds = array<i64: 32, 32>}, {pipeline_mode = #tpu.pipeline_mode<synchronous>, transform_indices = @transform_10, window_bounds = array<i64: 1, 32>}, {pipeline_mode = #tpu.pipeline_mode<synchronous>, transform_indices = @transform_11, window_bounds = array<i64: 1, 32>}, {pipeline_mode = #tpu.pipeline_mode<synchronous>, transform_indices = @transform_12, window_bounds = array<i64: 32, 16>}, {pipeline_mode = #tpu.pipeline_mode<synchronous>, transform_indices = @transform_13, window_bounds = array<i64: 1, 16>}, {pipeline_mode = #tpu.pipeline_mode<synchronous>, transform_indices = @transform_14, window_bounds = array<i64: 16, 32>}, {pipeline_mode = #tpu.pipeline_mode<synchronous>, transform_indices = @transform_15, window_bounds = array<i64: 1, 32>}, {pipeline_mode = #tpu.pipeline_mode<synchronous>, transform_indices = @transform_16, window_bounds = array<i64: 1, 32>}, {transform_indices = @transform_17, window_bounds = array<i64: 1, 8, 32>}]} {
    %c0 = arith.constant 0 : index
    %c0_0 = arith.constant 0 : index
    %c0_1 = arith.constant 0 : index
    %0 = vector.load %arg2[%c0, %c0_0, %c0_1] : memref<1x8x32xf32, #tpu.memory_space<vmem>>, vector<1x8x32xf32>
    %1 = vector.shape_cast %0 : vector<1x8x32xf32> to vector<8x32xf32>
    %c0_2 = arith.constant 0 : index
    %c0_3 = arith.constant 0 : index
    %c0_4 = arith.constant 0 : index
    %2 = vector.load %arg3[%c0_2, %c0_3, %c0_4] : memref<1x8x32xf32, #tpu.memory_space<vmem>>, vector<1x8x32xf32>
    %3 = vector.shape_cast %2 : vector<1x8x32xf32> to vector<8x32xf32>
    %c0_5 = arith.constant 0 : index
    %c0_6 = arith.constant 0 : index
    %c0_7 = arith.constant 0 : index
    %4 = vector.load %arg4[%c0_5, %c0_6, %c0_7] : memref<1x8x32xf32, #tpu.memory_space<vmem>>, vector<1x8x32xf32>
    %5 = vector.shape_cast %4 : vector<1x8x32xf32> to vector<8x32xf32>
    %c0_8 = arith.constant 0 : index
    %c0_9 = arith.constant 0 : index
    %6 = vector.load %arg5[%c0_8, %c0_9] : memref<32x32xf32, #tpu.memory_space<vmem>>, vector<32x32xf32>
    %cst = arith.constant dense<0.000000e+00> : vector<8x32xf32>
    %7 = tpu.matmul %1, %6, %cst {dimension_numbers = #tpu.dot_dimension_numbers<[1], [0], [0], [1], [0, 0, 1, 1], [], []>} : vector<8x32xf32>, vector<32x32xf32>, vector<8x32xf32> -> vector<8x32xf32>
    %c0_10 = arith.constant 0 : index
    %c0_11 = arith.constant 0 : index
    %8 = vector.load %arg6[%c0_10, %c0_11] : memref<1x32xf32, #tpu.memory_space<vmem>>, vector<1x32xf32>
    %9 = vector.broadcast %8 : vector<1x32xf32> to vector<8x32xf32>
    %10 = arith.addf %7, %9 : vector<8x32xf32>
    %c0_12 = arith.constant 0 : index
    %c0_13 = arith.constant 0 : index
    %11 = vector.load %arg7[%c0_12, %c0_13] : memref<32x32xf32, #tpu.memory_space<vmem>>, vector<32x32xf32>
    %cst_14 = arith.constant dense<0.000000e+00> : vector<8x32xf32>
    %12 = tpu.matmul %3, %11, %cst_14 {dimension_numbers = #tpu.dot_dimension_numbers<[1], [0], [0], [1], [0, 0, 1, 1], [], []>} : vector<8x32xf32>, vector<32x32xf32>, vector<8x32xf32> -> vector<8x32xf32>
    %c0_15 = arith.constant 0 : index
    %c0_16 = arith.constant 0 : index
    %13 = vector.load %arg8[%c0_15, %c0_16] : memref<1x32xf32, #tpu.memory_space<vmem>>, vector<1x32xf32>
    %14 = vector.broadcast %13 : vector<1x32xf32> to vector<8x32xf32>
    %15 = arith.addf %12, %14 : vector<8x32xf32>
    %c0_17 = arith.constant 0 : index
    %c0_18 = arith.constant 0 : index
    %16 = vector.load %arg9[%c0_17, %c0_18] : memref<32x32xf32, #tpu.memory_space<vmem>>, vector<32x32xf32>
    %cst_19 = arith.constant dense<0.000000e+00> : vector<8x32xf32>
    %17 = tpu.matmul %5, %16, %cst_19 {dimension_numbers = #tpu.dot_dimension_numbers<[1], [0], [0], [1], [0, 0, 1, 1], [], []>} : vector<8x32xf32>, vector<32x32xf32>, vector<8x32xf32> -> vector<8x32xf32>
    %c0_20 = arith.constant 0 : index
    %c0_21 = arith.constant 0 : index
    %18 = vector.load %arg10[%c0_20, %c0_21] : memref<1x32xf32, #tpu.memory_space<vmem>>, vector<1x32xf32>
    %19 = vector.broadcast %18 : vector<1x32xf32> to vector<8x32xf32>
    %20 = arith.addf %17, %19 : vector<8x32xf32>
    %cst_22 = arith.constant 0.000000e+00 : f32
    %21 = vector.broadcast %cst_22 : f32 to vector<8x32xf32>
    %22 = vector.extract_strided_slice %10 {offsets = [0, 0], sizes = [8, 8], strides = [1, 1]} : vector<8x32xf32> to vector<8x8xf32>
    %23 = vector.extract_strided_slice %15 {offsets = [0, 0], sizes = [8, 8], strides = [1, 1]} : vector<8x32xf32> to vector<8x8xf32>
    %24 = vector.extract_strided_slice %20 {offsets = [0, 0], sizes = [8, 8], strides = [1, 1]} : vector<8x32xf32> to vector<8x8xf32>
    %cst_23 = arith.constant dense<0.000000e+00> : vector<8x8xf32>
    %25 = tpu.matmul %22, %23, %cst_23 {dimension_numbers = #tpu.dot_dimension_numbers<[1], [1], [0], [0], [0, 0, 1, 0], [], []>} : vector<8x8xf32>, vector<8x8xf32>, vector<8x8xf32> -> vector<8x8xf32>
    %cst_24 = arith.constant 0.176776692 : f32
    %26 = vector.broadcast %cst_24 : f32 to vector<8x8xf32>
    %27 = arith.mulf %25, %26 : vector<8x8xf32>
    %cst_25 = arith.constant dense<0xFF800000> : vector<8xf32>
    %28 = vector.multi_reduction <maximumf>, %27, %cst_25 [1] : vector<8x8xf32> to vector<8xf32>
    %29 = vector.shape_cast %28 : vector<8xf32> to vector<8x1xf32>
    %30 = vector.broadcast %29 : vector<8x1xf32> to vector<8x8xf32>
    %31 = arith.subf %27, %30 : vector<8x8xf32>
    %32 = math.exp %31 : vector<8x8xf32>
    %cst_26 = arith.constant dense<0.000000e+00> : vector<8xf32>
    %33 = vector.multi_reduction <add>, %32, %cst_26 [1] : vector<8x8xf32> to vector<8xf32>
    %34 = vector.shape_cast %33 : vector<8xf32> to vector<8x1xf32>
    %35 = vector.broadcast %34 : vector<8x1xf32> to vector<8x8xf32>
    %36 = arith.divf %32, %35 : vector<8x8xf32>
    %cst_27 = arith.constant dense<0.000000e+00> : vector<8x8xf32>
    %37 = tpu.matmul %36, %24, %cst_27 {dimension_numbers = #tpu.dot_dimension_numbers<[1], [0], [0], [1], [0, 0, 1, 1], [], []>} : vector<8x8xf32>, vector<8x8xf32>, vector<8x8xf32> -> vector<8x8xf32>
    %c0_28 = arith.constant 0 : index
    %c0_29 = arith.constant 0 : index
    %38 = vector.load %arg11[%c0_28, %c0_29] : memref<32x32xf32, #tpu.memory_space<vmem>>, vector<8x32xf32>
    %cst_30 = arith.constant dense<0.000000e+00> : vector<8x32xf32>
    %39 = tpu.matmul %37, %38, %cst_30 {dimension_numbers = #tpu.dot_dimension_numbers<[1], [0], [0], [1], [0, 0, 1, 1], [], []>} : vector<8x8xf32>, vector<8x32xf32>, vector<8x32xf32> -> vector<8x32xf32>
    %40 = arith.addf %21, %39 : vector<8x32xf32>
    %41 = vector.extract_strided_slice %10 {offsets = [0, 8], sizes = [8, 8], strides = [1, 1]} : vector<8x32xf32> to vector<8x8xf32>
    %42 = vector.extract_strided_slice %15 {offsets = [0, 8], sizes = [8, 8], strides = [1, 1]} : vector<8x32xf32> to vector<8x8xf32>
    %43 = vector.extract_strided_slice %20 {offsets = [0, 8], sizes = [8, 8], strides = [1, 1]} : vector<8x32xf32> to vector<8x8xf32>
    %cst_31 = arith.constant dense<0.000000e+00> : vector<8x8xf32>
    %44 = tpu.matmul %41, %42, %cst_31 {dimension_numbers = #tpu.dot_dimension_numbers<[1], [1], [0], [0], [0, 0, 1, 0], [], []>} : vector<8x8xf32>, vector<8x8xf32>, vector<8x8xf32> -> vector<8x8xf32>
    %cst_32 = arith.constant 0.176776692 : f32
    %45 = vector.broadcast %cst_32 : f32 to vector<8x8xf32>
    %46 = arith.mulf %44, %45 : vector<8x8xf32>
    %cst_33 = arith.constant dense<0xFF800000> : vector<8xf32>
    %47 = vector.multi_reduction <maximumf>, %46, %cst_33 [1] : vector<8x8xf32> to vector<8xf32>
    %48 = vector.shape_cast %47 : vector<8xf32> to vector<8x1xf32>
    %49 = vector.broadcast %48 : vector<8x1xf32> to vector<8x8xf32>
    %50 = arith.subf %46, %49 : vector<8x8xf32>
    %51 = math.exp %50 : vector<8x8xf32>
    %cst_34 = arith.constant dense<0.000000e+00> : vector<8xf32>
    %52 = vector.multi_reduction <add>, %51, %cst_34 [1] : vector<8x8xf32> to vector<8xf32>
    %53 = vector.shape_cast %52 : vector<8xf32> to vector<8x1xf32>
    %54 = vector.broadcast %53 : vector<8x1xf32> to vector<8x8xf32>
    %55 = arith.divf %51, %54 : vector<8x8xf32>
    %cst_35 = arith.constant dense<0.000000e+00> : vector<8x8xf32>
    %56 = tpu.matmul %55, %43, %cst_35 {dimension_numbers = #tpu.dot_dimension_numbers<[1], [0], [0], [1], [0, 0, 1, 1], [], []>} : vector<8x8xf32>, vector<8x8xf32>, vector<8x8xf32> -> vector<8x8xf32>
    %c8 = arith.constant 8 : index
    %c0_36 = arith.constant 0 : index
    %57 = vector.load %arg11[%c8, %c0_36] : memref<32x32xf32, #tpu.memory_space<vmem>>, vector<8x32xf32>
    %cst_37 = arith.constant dense<0.000000e+00> : vector<8x32xf32>
    %58 = tpu.matmul %56, %57, %cst_37 {dimension_numbers = #tpu.dot_dimension_numbers<[1], [0], [0], [1], [0, 0, 1, 1], [], []>} : vector<8x8xf32>, vector<8x32xf32>, vector<8x32xf32> -> vector<8x32xf32>
    %59 = arith.addf %40, %58 : vector<8x32xf32>
    %60 = vector.extract_strided_slice %10 {offsets = [0, 16], sizes = [8, 8], strides = [1, 1]} : vector<8x32xf32> to vector<8x8xf32>
    %61 = vector.extract_strided_slice %15 {offsets = [0, 16], sizes = [8, 8], strides = [1, 1]} : vector<8x32xf32> to vector<8x8xf32>
    %62 = vector.extract_strided_slice %20 {offsets = [0, 16], sizes = [8, 8], strides = [1, 1]} : vector<8x32xf32> to vector<8x8xf32>
    %cst_38 = arith.constant dense<0.000000e+00> : vector<8x8xf32>
    %63 = tpu.matmul %60, %61, %cst_38 {dimension_numbers = #tpu.dot_dimension_numbers<[1], [1], [0], [0], [0, 0, 1, 0], [], []>} : vector<8x8xf32>, vector<8x8xf32>, vector<8x8xf32> -> vector<8x8xf32>
    %cst_39 = arith.constant 0.176776692 : f32
    %64 = vector.broadcast %cst_39 : f32 to vector<8x8xf32>
    %65 = arith.mulf %63, %64 : vector<8x8xf32>
    %cst_40 = arith.constant dense<0xFF800000> : vector<8xf32>
    %66 = vector.multi_reduction <maximumf>, %65, %cst_40 [1] : vector<8x8xf32> to vector<8xf32>
    %67 = vector.shape_cast %66 : vector<8xf32> to vector<8x1xf32>
    %68 = vector.broadcast %67 : vector<8x1xf32> to vector<8x8xf32>
    %69 = arith.subf %65, %68 : vector<8x8xf32>
    %70 = math.exp %69 : vector<8x8xf32>
    %cst_41 = arith.constant dense<0.000000e+00> : vector<8xf32>
    %71 = vector.multi_reduction <add>, %70, %cst_41 [1] : vector<8x8xf32> to vector<8xf32>
    %72 = vector.shape_cast %71 : vector<8xf32> to vector<8x1xf32>
    %73 = vector.broadcast %72 : vector<8x1xf32> to vector<8x8xf32>
    %74 = arith.divf %70, %73 : vector<8x8xf32>
    %cst_42 = arith.constant dense<0.000000e+00> : vector<8x8xf32>
    %75 = tpu.matmul %74, %62, %cst_42 {dimension_numbers = #tpu.dot_dimension_numbers<[1], [0], [0], [1], [0, 0, 1, 1], [], []>} : vector<8x8xf32>, vector<8x8xf32>, vector<8x8xf32> -> vector<8x8xf32>
    %c16 = arith.constant 16 : index
    %c0_43 = arith.constant 0 : index
    %76 = vector.load %arg11[%c16, %c0_43] : memref<32x32xf32, #tpu.memory_space<vmem>>, vector<8x32xf32>
    %cst_44 = arith.constant dense<0.000000e+00> : vector<8x32xf32>
    %77 = tpu.matmul %75, %76, %cst_44 {dimension_numbers = #tpu.dot_dimension_numbers<[1], [0], [0], [1], [0, 0, 1, 1], [], []>} : vector<8x8xf32>, vector<8x32xf32>, vector<8x32xf32> -> vector<8x32xf32>
    %78 = arith.addf %59, %77 : vector<8x32xf32>
    %79 = vector.extract_strided_slice %10 {offsets = [0, 24], sizes = [8, 8], strides = [1, 1]} : vector<8x32xf32> to vector<8x8xf32>
    %80 = vector.extract_strided_slice %15 {offsets = [0, 24], sizes = [8, 8], strides = [1, 1]} : vector<8x32xf32> to vector<8x8xf32>
    %81 = vector.extract_strided_slice %20 {offsets = [0, 24], sizes = [8, 8], strides = [1, 1]} : vector<8x32xf32> to vector<8x8xf32>
    %cst_45 = arith.constant dense<0.000000e+00> : vector<8x8xf32>
    %82 = tpu.matmul %79, %80, %cst_45 {dimension_numbers = #tpu.dot_dimension_numbers<[1], [1], [0], [0], [0, 0, 1, 0], [], []>} : vector<8x8xf32>, vector<8x8xf32>, vector<8x8xf32> -> vector<8x8xf32>
    %cst_46 = arith.constant 0.176776692 : f32
    %83 = vector.broadcast %cst_46 : f32 to vector<8x8xf32>
    %84 = arith.mulf %82, %83 : vector<8x8xf32>
    %cst_47 = arith.constant dense<0xFF800000> : vector<8xf32>
    %85 = vector.multi_reduction <maximumf>, %84, %cst_47 [1] : vector<8x8xf32> to vector<8xf32>
    %86 = vector.shape_cast %85 : vector<8xf32> to vector<8x1xf32>
    %87 = vector.broadcast %86 : vector<8x1xf32> to vector<8x8xf32>
    %88 = arith.subf %84, %87 : vector<8x8xf32>
    %89 = math.exp %88 : vector<8x8xf32>
    %cst_48 = arith.constant dense<0.000000e+00> : vector<8xf32>
    %90 = vector.multi_reduction <add>, %89, %cst_48 [1] : vector<8x8xf32> to vector<8xf32>
    %91 = vector.shape_cast %90 : vector<8xf32> to vector<8x1xf32>
    %92 = vector.broadcast %91 : vector<8x1xf32> to vector<8x8xf32>
    %93 = arith.divf %89, %92 : vector<8x8xf32>
    %cst_49 = arith.constant dense<0.000000e+00> : vector<8x8xf32>
    %94 = tpu.matmul %93, %81, %cst_49 {dimension_numbers = #tpu.dot_dimension_numbers<[1], [0], [0], [1], [0, 0, 1, 1], [], []>} : vector<8x8xf32>, vector<8x8xf32>, vector<8x8xf32> -> vector<8x8xf32>
    %c24 = arith.constant 24 : index
    %c0_50 = arith.constant 0 : index
    %95 = vector.load %arg11[%c24, %c0_50] : memref<32x32xf32, #tpu.memory_space<vmem>>, vector<8x32xf32>
    %cst_51 = arith.constant dense<0.000000e+00> : vector<8x32xf32>
    %96 = tpu.matmul %94, %95, %cst_51 {dimension_numbers = #tpu.dot_dimension_numbers<[1], [0], [0], [1], [0, 0, 1, 1], [], []>} : vector<8x8xf32>, vector<8x32xf32>, vector<8x32xf32> -> vector<8x32xf32>
    %97 = arith.addf %78, %96 : vector<8x32xf32>
    %c0_52 = arith.constant 0 : index
    %c0_53 = arith.constant 0 : index
    %98 = vector.load %arg12[%c0_52, %c0_53] : memref<1x32xf32, #tpu.memory_space<vmem>>, vector<1x32xf32>
    %99 = vector.broadcast %98 : vector<1x32xf32> to vector<8x32xf32>
    %100 = arith.addf %97, %99 : vector<8x32xf32>
    %101 = arith.addf %100, %1 : vector<8x32xf32>
    %102 = arith.mulf %101, %101 : vector<8x32xf32>
    %cst_54 = arith.constant dense<0.000000e+00> : vector<8xf32>
    %103 = vector.multi_reduction <add>, %102, %cst_54 [1] : vector<8x32xf32> to vector<8xf32>
    %104 = vector.shape_cast %103 : vector<8xf32> to vector<8x1xf32>
    %105 = math.sqrt %104 : vector<8x1xf32>
    %cst_55 = arith.constant 0.176776692 : f32
    %106 = vector.broadcast %cst_55 : f32 to vector<8x1xf32>
    %107 = arith.mulf %105, %106 : vector<8x1xf32>
    %c0_56 = arith.constant 0 : index
    %c0_57 = arith.constant 0 : index
    %108 = vector.load %arg13[%c0_56, %c0_57] : memref<1x32xf32, #tpu.memory_space<vmem>>, vector<1x32xf32>
    %cst_58 = arith.constant 9.99999993E-9 : f32
    %109 = vector.broadcast %cst_58 : f32 to vector<8x1xf32>
    %110 = arith.addf %107, %109 : vector<8x1xf32>
    %111 = vector.broadcast %110 : vector<8x1xf32> to vector<8x32xf32>
    %112 = arith.divf %101, %111 : vector<8x32xf32>
    %113 = vector.broadcast %108 : vector<1x32xf32> to vector<8x32xf32>
    %114 = arith.mulf %113, %112 : vector<8x32xf32>
    %c0_59 = arith.constant 0 : index
    %c0_60 = arith.constant 0 : index
    %115 = vector.load %arg14[%c0_59, %c0_60] : memref<32x16xf32, #tpu.memory_space<vmem>>, vector<32x16xf32>
    %cst_61 = arith.constant dense<0.000000e+00> : vector<8x16xf32>
    %116 = tpu.matmul %114, %115, %cst_61 {dimension_numbers = #tpu.dot_dimension_numbers<[1], [0], [0], [1], [0, 0, 1, 1], [], []>} : vector<8x32xf32>, vector<32x16xf32>, vector<8x16xf32> -> vector<8x16xf32>
    %c0_62 = arith.constant 0 : index
    %c0_63 = arith.constant 0 : index
    %117 = vector.load %arg15[%c0_62, %c0_63] : memref<1x16xf32, #tpu.memory_space<vmem>>, vector<1x16xf32>
    %118 = vector.broadcast %117 : vector<1x16xf32> to vector<8x16xf32>
    %119 = arith.addf %116, %118 : vector<8x16xf32>
    %cst_64 = arith.constant 0.000000e+00 : f32
    %120 = vector.broadcast %cst_64 : f32 to vector<8x16xf32>
    %121 = arith.maximumf %119, %120 : vector<8x16xf32>
    %c0_65 = arith.constant 0 : index
    %c0_66 = arith.constant 0 : index
    %122 = vector.load %arg16[%c0_65, %c0_66] : memref<16x32xf32, #tpu.memory_space<vmem>>, vector<16x32xf32>
    %cst_67 = arith.constant dense<0.000000e+00> : vector<8x32xf32>
    %123 = tpu.matmul %121, %122, %cst_67 {dimension_numbers = #tpu.dot_dimension_numbers<[1], [0], [0], [1], [0, 0, 1, 1], [], []>} : vector<8x16xf32>, vector<16x32xf32>, vector<8x32xf32> -> vector<8x32xf32>
    %c0_68 = arith.constant 0 : index
    %c0_69 = arith.constant 0 : index
    %124 = vector.load %arg17[%c0_68, %c0_69] : memref<1x32xf32, #tpu.memory_space<vmem>>, vector<1x32xf32>
    %125 = vector.broadcast %124 : vector<1x32xf32> to vector<8x32xf32>
    %126 = arith.addf %123, %125 : vector<8x32xf32>
    %127 = arith.addf %114, %126 : vector<8x32xf32>
    %128 = arith.mulf %127, %127 : vector<8x32xf32>
    %cst_70 = arith.constant dense<0.000000e+00> : vector<8xf32>
    %129 = vector.multi_reduction <add>, %128, %cst_70 [1] : vector<8x32xf32> to vector<8xf32>
    %130 = vector.shape_cast %129 : vector<8xf32> to vector<8x1xf32>
    %131 = math.sqrt %130 : vector<8x1xf32>
    %cst_71 = arith.constant 0.176776692 : f32
    %132 = vector.broadcast %cst_71 : f32 to vector<8x1xf32>
    %133 = arith.mulf %131, %132 : vector<8x1xf32>
    %c0_72 = arith.constant 0 : index
    %c0_73 = arith.constant 0 : index
    %134 = vector.load %arg18[%c0_72, %c0_73] : memref<1x32xf32, #tpu.memory_space<vmem>>, vector<1x32xf32>
    %cst_74 = arith.constant 9.99999993E-9 : f32
    %135 = vector.broadcast %cst_74 : f32 to vector<8x1xf32>
    %136 = arith.addf %133, %135 : vector<8x1xf32>
    %137 = vector.broadcast %136 : vector<8x1xf32> to vector<8x32xf32>
    %138 = arith.divf %127, %137 : vector<8x32xf32>
    %139 = vector.broadcast %134 : vector<1x32xf32> to vector<8x32xf32>
    %140 = arith.mulf %139, %138 : vector<8x32xf32>
    %c0_75 = arith.constant 0 : index
    %c0_76 = arith.constant 0 : index
    %c0_77 = arith.constant 0 : index
    %141 = vector.load %arg19[%c0_75, %c0_76, %c0_77] : memref<1x8x32xf32, #tpu.memory_space<vmem>>, vector<1x8x32xf32>
    %142 = vector.shape_cast %141 : vector<1x8x32xf32> to vector<8x32xf32>
    %143 = vector.shape_cast %140 : vector<8x32xf32> to vector<1x8x32xf32>
    tpu.vector_store %arg19[%c0_75, %c0_76, %c0_77], %143 {strides = array<i32>} : memref<1x8x32xf32, #tpu.memory_space<vmem>>, vector<1x8x32xf32>,
    return
  }
  func.func @transform_0(%arg0: i32, %arg1: i32) -> (i32, i32, i32) {
    %c0_i32 = arith.constant 0 : i32
    %c0_i32_0 = arith.constant 0 : i32
    return %arg0, %arg1, %c0_i32 : i32, i32, i32
  }
  func.func @transform_1(%arg0: i32, %arg1: i32) -> (i32, i32, i32) {
    %c0_i32 = arith.constant 0 : i32
    %c0_i32_0 = arith.constant 0 : i32
    %c0_i32_1 = arith.constant 0 : i32
    return %arg0, %c0_i32, %c0_i32_0 : i32, i32, i32
  }
  func.func @transform_2(%arg0: i32, %arg1: i32) -> (i32, i32, i32) {
    %c0_i32 = arith.constant 0 : i32
    %c0_i32_0 = arith.constant 0 : i32
    %c0_i32_1 = arith.constant 0 : i32
    return %arg0, %c0_i32, %c0_i32_0 : i32, i32, i32
  }
  func.func @transform_3(%arg0: i32, %arg1: i32) -> (i32, i32) {
    %c0_i32 = arith.constant 0 : i32
    %c0_i32_0 = arith.constant 0 : i32
    %c0_i32_1 = arith.constant 0 : i32
    return %c0_i32, %c0_i32_0 : i32, i32
  }
  func.func @transform_4(%arg0: i32, %arg1: i32) -> (i32, i32) {
    %c0_i32 = arith.constant 0 : i32
    %c0_i32_0 = arith.constant 0 : i32
    %c0_i32_1 = arith.constant 0 : i32
    return %c0_i32, %c0_i32_0 : i32, i32
  }
  func.func @transform_5(%arg0: i32, %arg1: i32) -> (i32, i32) {
    %c0_i32 = arith.constant 0 : i32
    %c0_i32_0 = arith.constant 0 : i32
    %c0_i32_1 = arith.constant 0 : i32
    return %c0_i32, %c0_i32_0 : i32, i32
  }
  func.func @transform_6(%arg0: i32, %arg1: i32) -> (i32, i32) {
    %c0_i32 = arith.constant 0 : i32
    %c0_i32_0 = arith.constant 0 : i32
    %c0_i32_1 = arith.constant 0 : i32
    return %c0_i32, %c0_i32_0 : i32, i32
  }
  func.func @transform_7(%arg0: i32, %arg1: i32) -> (i32, i32) {
    %c0_i32 = arith.constant 0 : i32
    %c0_i32_0 = arith.constant 0 : i32
    %c0_i32_1 = arith.constant 0 : i32
    return %c0_i32, %c0_i32_0 : i32, i32
  }
  func.func @transform_8(%arg0: i32, %arg1: i32) -> (i32, i32) {
    %c0_i32 = arith.constant 0 : i32
    %c0_i32_0 = arith.constant 0 : i32
    %c0_i32_1 = arith.constant 0 : i32
    return %c0_i32, %c0_i32_0 : i32, i32
  }
  func.func @transform_9(%arg0: i32, %arg1: i32) -> (i32, i32) {
    %c0_i32 = arith.constant 0 : i32
    %c0_i32_0 = arith.constant 0 : i32
    %c0_i32_1 = arith.constant 0 : i32
    return %c0_i32, %c0_i32_0 : i32, i32
  }
  func.func @transform_10(%arg0: i32, %arg1: i32) -> (i32, i32) {
    %c0_i32 = arith.constant 0 : i32
    %c0_i32_0 = arith.constant 0 : i32
    %c0_i32_1 = arith.constant 0 : i32
    return %c0_i32, %c0_i32_0 : i32, i32
  }
  func.func @transform_11(%arg0: i32, %arg1: i32) -> (i32, i32) {
    %c0_i32 = arith.constant 0 : i32
    %c0_i32_0 = arith.constant 0 : i32
    %c0_i32_1 = arith.constant 0 : i32
    return %c0_i32, %c0_i32_0 : i32, i32
  }
  func.func @transform_12(%arg0: i32, %arg1: i32) -> (i32, i32) {
    %c0_i32 = arith.constant 0 : i32
    %c0_i32_0 = arith.constant 0 : i32
    %c0_i32_1 = arith.constant 0 : i32
    return %c0_i32, %c0_i32_0 : i32, i32
  }
  func.func @transform_13(%arg0: i32, %arg1: i32) -> (i32, i32) {
    %c0_i32 = arith.constant 0 : i32
    %c0_i32_0 = arith.constant 0 : i32
    %c0_i32_1 = arith.constant 0 : i32
    return %c0_i32, %c0_i32_0 : i32, i32
  }
  func.func @transform_14(%arg0: i32, %arg1: i32) -> (i32, i32) {
    %c0_i32 = arith.constant 0 : i32
    %c0_i32_0 = arith.constant 0 : i32
    %c0_i32_1 = arith.constant 0 : i32
    return %c0_i32, %c0_i32_0 : i32, i32
  }
  func.func @transform_15(%arg0: i32, %arg1: i32) -> (i32, i32) {
    %c0_i32 = arith.constant 0 : i32
    %c0_i32_0 = arith.constant 0 : i32
    %c0_i32_1 = arith.constant 0 : i32
    return %c0_i32, %c0_i32_0 : i32, i32
  }
  func.func @transform_16(%arg0: i32, %arg1: i32) -> (i32, i32) {
    %c0_i32 = arith.constant 0 : i32
    %c0_i32_0 = arith.constant 0 : i32
    %c0_i32_1 = arith.constant 0 : i32
    return %c0_i32, %c0_i32_0 : i32, i32
  }
  func.func @transform_17(%arg0: i32, %arg1: i32) -> (i32, i32, i32) {
    %c0_i32 = arith.constant 0 : i32
    %c0_i32_0 = arith.constant 0 : i32
    return %arg0, %arg1, %c0_i32 : i32, i32, i32
  }
}

</mosaic_0001>

<llo_original>
// kernel: tpu_custom_call.1
$region0: #{tpu_custom_call.1}
  #allocation0 [shape = 'u32[]', space=smem, size = 0x4, offset = 0x4, fixed_abs, tag = 'smem constant byte address 0x4 - core index']
  #allocation1 [shape = 'u32[144,128]{1,0:T(1,128)}', space=vmem, size = 0x12000, scoped, tag = 'internal scratch']
  %s0 = inlined_call_operand.hbm [shape: f32[2,8,32], index: 0, kind: input, shape index: {}]
  %s1 = inlined_call_operand.hbm [shape: f32[2,8,32], index: 1, kind: input, shape index: {}]
  %s2 = inlined_call_operand.hbm [shape: f32[2,8,32], index: 2, kind: input, shape index: {}]
  %s3 = inlined_call_operand.vmem [shape: f32[32,32], index: 3, kind: input, shape index: {}]
  %s4 = inlined_call_operand.vmem [shape: f32[1,32], index: 4, kind: input, shape index: {}]
  %s5 = inlined_call_operand.vmem [shape: f32[32,32], index: 5, kind: input, shape index: {}]
  %s6 = inlined_call_operand.hbm [shape: f32[1,32], index: 6, kind: input, shape index: {}]
  %s7 = inlined_call_operand.hbm [shape: f32[32,32], index: 7, kind: input, shape index: {}]
  %s8 = inlined_call_operand.hbm [shape: f32[1,32], index: 8, kind: input, shape index: {}]
  %s9 = inlined_call_operand.hbm [shape: f32[32,32], index: 9, kind: input, shape index: {}]
  %s10 = inlined_call_operand.hbm [shape: f32[1,32], index: 10, kind: input, shape index: {}]
  %s11 = inlined_call_operand.hbm [shape: f32[1,32], index: 11, kind: input, shape index: {}]
  %s12 = inlined_call_operand.vmem [shape: f32[32,16], index: 12, kind: input, shape index: {}]
  %s13 = inlined_call_operand.hbm [shape: f32[1,16], index: 13, kind: input, shape index: {}]
  %s14 = inlined_call_operand.vmem [shape: f32[16,32], index: 14, kind: input, shape index: {}]
  %s15 = inlined_call_operand.vmem [shape: f32[1,32], index: 15, kind: input, shape index: {}]
  %s16 = inlined_call_operand.vmem [shape: f32[1,32], index: 16, kind: input, shape index: {}]
  %s17 = inlined_call_operand.hbm [shape: f32[2,8,32], index: 17, kind: output, shape index: {}]
  %s18 = sld [smem:[#allocation0]]
  $region141: #{tpu_custom_call.1} parent=0
    _
  %s20 = ssub.s32 1, %s18
  %s21 = scalar_select 0, %s20, %s18
  $region1: #{tpu_custom_call.1} parent=0
    #allocation2 [shape = 'u8[8192]{0}', space=vmem, size = 0x2000, scoped, tag = 'input window, operand 0']
    #allocation3 [shape = 's32[2]{0}', space=sflag, size = 0x8, scoped, tag = 'scoped memory for tpu_custom_call.1']
    #allocation4 [shape = 's32[2]{0}', space=sflag, size = 0x8, scoped, tag = 'scoped memory for tpu_custom_call.1']
    #allocation5 [shape = 'u8[8192]{0}', space=vmem, size = 0x2000, scoped, tag = 'input window, operand 1']
    #allocation6 [shape = 's32[2]{0}', space=sflag, size = 0x8, scoped, tag = 'scoped memory for tpu_custom_call.1']
    #allocation7 [shape = 'u8[8192]{0}', space=vmem, size = 0x2000, scoped, tag = 'input window, operand 2']
    #allocation8 [shape = 'u8[512]{0}', space=vmem, size = 0x400, scoped, tag = 'input window, operand 6, single buffered']
    #allocation9 [shape = 's32[1]{0}', space=sflag, size = 0x4, scoped, tag = 'scoped memory for tpu_custom_call.1']
    #allocation10 [shape = 'u8[16384]{0}', space=vmem, size = 0x4000, scoped, tag = 'input window, operand 7, single buffered']
    #allocation11 [shape = 'u8[512]{0}', space=vmem, size = 0x400, scoped, tag = 'input window, operand 8, single buffered']
    #allocation12 [shape = 's32[1]{0}', space=sflag, size = 0x4, scoped, tag = 'scoped memory for tpu_custom_call.1']
    #allocation13 [shape = 'u8[16384]{0}', space=vmem, size = 0x4000, scoped, tag = 'input window, operand 9, single buffered']
    #allocation14 [shape = 'u8[512]{0}', space=vmem, size = 0x400, scoped, tag = 'input window, operand 10, single buffered']
    #allocation15 [shape = 's32[1]{0}', space=sflag, size = 0x4, scoped, tag = 'scoped memory for tpu_custom_call.1']
    #allocation16 [shape = 'u8[512]{0}', space=vmem, size = 0x400, scoped, tag = 'input window, operand 11, single buffered']
    #allocation17 [shape = 'u8[512]{0}', space=vmem, size = 0x400, scoped, tag = 'input window, operand 13, single buffered']
    #allocation18 [shape = 's32[1]{0}', space=sflag, size = 0x4, scoped, tag = 'scoped memory for tpu_custom_call.1']
    #allocation19 [shape = 'u8[8192]{0}', space=vmem, size = 0x2000, scoped, tag = 'output window, operand 0']
    %22 = vsyncpa [#allocation3], 0
    %s23 = scalar_lea.sflag [#allocation3], 1
    %24 = vsyncpa %s23, 0
    %25 = vsyncpa [#allocation6], 0
    %s26 = scalar_lea.sflag [#allocation6], 1
    %27 = vsyncpa %s26, 0
    %28 = vsyncpa [#allocation9], 0
    %29 = vsyncpa [#allocation12], 0
    %30 = vsyncpa [#allocation15], 0
    %31 = vsyncpa [#allocation18], 0
    %32 = vsyncpa [#allocation4], 0
    %s33 = scalar_lea.sflag [#allocation4], 1
    %34 = vsyncpa %s33, 0
    loop: start=0, step=1, limit=4
    $region2: #{tpu_custom_call.1} parent=1 // loop_pre_header
      _
    $region3: #{tpu_custom_call.1} parent=1 // loop_header
      %s36 = sphi 0, %s40
      %p37 = scmp.ge.s32.totalorder %s36, 4
      %s43 = sphi 0, %s55
      %s44 = sphi 0, %s51
      %s45 = sphi 0, %s43
      %s46 = sphi 0, %s44
      %s47 = sphi 0, %s45
      %s48 = sphi 0, %s46
      %s60 = sphi 0, %s62
      %s63 = sphi 0, %s60
      %s64 = sphi 0, %s63
      %s80 = sphi 0, %s64
      %s86 = sphi 0, %s88
      %s89 = sphi 0, %s86
      %s90 = sphi 0, %s89
      %s106 = sphi 0, %s90
      %s112 = sphi 0, %s114
      %s115 = sphi 0, %s112
      %s116 = sphi 0, %s115
      %s132 = sphi 0, %s116
      %s136 = sphi 0, %s136
      %s138 = sphi 0, %s136
      %s139 = sphi 0, %s138
      %s153 = sphi 0, %s139
      %s157 = sphi 0, %s157
      %s159 = sphi 0, %s157
      %s160 = sphi 0, %s159
      %s174 = sphi 0, %s160
      %s178 = sphi 0, %s178
      %s180 = sphi 0, %s178
      %s181 = sphi 0, %s180
      %s195 = sphi 0, %s181
      %s199 = sphi 0, %s199
      %s201 = sphi 0, %s199
      %s202 = sphi 0, %s201
      %s216 = sphi 0, %s202
      %s220 = sphi 0, %s220
      %s222 = sphi 0, %s220
      %s223 = sphi 0, %s222
      %s237 = sphi 0, %s223
      %s241 = sphi 0, %s241
      %s243 = sphi 0, %s241
      %s244 = sphi 0, %s243
      %s258 = sphi 0, %s244
      %s262 = sphi 0, %s262
      %s264 = sphi 0, %s262
      %s265 = sphi 0, %s264
      %s279 = sphi 0, %s265
      %s283 = sphi 0, %s283
      %s285 = sphi 0, %s283
      %s286 = sphi 0, %s285
      %s300 = sphi 0, %s286
      %s304 = sphi 0, %s304
      %s306 = sphi 0, %s304
      %s307 = sphi 0, %s306
      %s321 = sphi 0, %s307
      %s325 = sphi 0, %s325
      %s327 = sphi 0, %s325
      %s328 = sphi 0, %s327
      %s342 = sphi 0, %s328
      %s346 = sphi 0, %s346
      %s348 = sphi 0, %s346
      %s349 = sphi 0, %s348
      %s363 = sphi 0, %s349
      %s367 = sphi 0, %s367
      %s369 = sphi 0, %s367
      %s370 = sphi 0, %s369
      %s384 = sphi 0, %s370
      %s388 = sphi 0, %s388
      %s390 = sphi 0, %s388
      %s391 = sphi 0, %s390
      %s405 = sphi 0, %s391
      %s409 = sphi 0, %s409
      %s411 = sphi 0, %s409
      %s412 = sphi 0, %s411
      %s426 = sphi 0, %s412
      %s434 = sphi 0, %s436
      %s437 = sphi 0, %s434
      %s438 = sphi 0, %s437
      %s454 = sphi 0, %s438
    $region4: #{tpu_custom_call.1} parent=1 // loop_header_branch
      %39 = sbr.rel (%p37) target = $region8
    $region5: #{tpu_custom_call.1} parent=1 // loop_body
      %s41 = ssub.s32 %s36, 1
      %s42 = ssub.s32 %s36, 2
      %s49 = sadd.s32 1, %s44
      %p50 = scmp.ge.s32.totalorder %s49, 1
      %s51 = scalar_select %p50, 0, %s49
      %s52 = sadd.s32 1, %s43
      %s53 = scalar_select %p50, %s52, %s43
      %p54 = scmp.ge.s32.totalorder %s53, 2
      %s55 = scalar_select %p54, 0, %s53
      %s56 = ssub.s32 %s43, %s55
      %s57 = ssub.s32 %s44, %s51
      %s58 = sor.u32 %s56, %s57
      %p59 = scmp.eq.s32.totalorder %s58, 0
      %s61 = sadd.s32 %s60, 1
      %s62 = scalar_select %p59, %s60, %s61
      %p65 = pneg %p59
      %p66 = scmp.eq.s32.totalorder %s36, 1
      %p67 = por %p65, %p66
      %p68 = scmp.ne.s32.totalorder %s60, %s63
      %p69 = scmp.eq.s32.totalorder %s36, 0
      %p70 = por %p68, %p69
      %p71 = scmp.ne.s32.totalorder %s60, %s63
      %p72 = scmp.eq.s32.totalorder %s41, 1
      %p73 = por %p71, %p72
      %p74 = scmp.ne.s32.totalorder %s63, %s64
      %p75 = scmp.eq.s32.totalorder %s41, 0
      %p76 = por %p74, %p75
      %p77 = scmp.ne.s32.totalorder %s63, %s64
      %p78 = scmp.eq.s32.totalorder %s42, 1
      %p79 = por %p77, %p78
      %p81 = scmp.ne.s32.totalorder %s64, %s80
      %p82 = scmp.eq.s32.totalorder %s42, 0
      %p83 = por %p81, %p82
      %s84 = ssub.s32 %s43, %s55
      %p85 = scmp.eq.s32.totalorder %s84, 0
      %s87 = sadd.s32 %s86, 1
      %s88 = scalar_select %p85, %s86, %s87
      %p91 = pneg %p85
      %p92 = scmp.eq.s32.totalorder %s36, 1
      %p93 = por %p91, %p92
      %p94 = scmp.ne.s32.totalorder %s86, %s89
      %p95 = scmp.eq.s32.totalorder %s36, 0
      %p96 = por %p94, %p95
      %p97 = scmp.ne.s32.totalorder %s86, %s89
      %p98 = scmp.eq.s32.totalorder %s41, 1
      %p99 = por %p97, %p98
      %p100 = scmp.ne.s32.totalorder %s89, %s90
      %p101 = scmp.eq.s32.totalorder %s41, 0
      %p102 = por %p100, %p101
      %p103 = scmp.ne.s32.totalorder %s89, %s90
      %p104 = scmp.eq.s32.totalorder %s42, 1
      %p105 = por %p103, %p104
      %p107 = scmp.ne.s32.totalorder %s90, %s106
      %p108 = scmp.eq.s32.totalorder %s42, 0
      %p109 = por %p107, %p108
      %s110 = ssub.s32 %s43, %s55
      %p111 = scmp.eq.s32.totalorder %s110, 0
      %s113 = sadd.s32 %s112, 1
      %s114 = scalar_select %p111, %s112, %s113
      %p117 = pneg %p111
      %p118 = scmp.eq.s32.totalorder %s36, 1
      %p119 = por %p117, %p118
      %p120 = scmp.ne.s32.totalorder %s112, %s115
      %p121 = scmp.eq.s32.totalorder %s36, 0
      %p122 = por %p120, %p121
      %p123 = scmp.ne.s32.totalorder %s112, %s115
      %p124 = scmp.eq.s32.totalorder %s41, 1
      %p125 = por %p123, %p124
      %p126 = scmp.ne.s32.totalorder %s115, %s116
      %p127 = scmp.eq.s32.totalorder %s41, 0
      %p128 = por %p126, %p127
      %p129 = scmp.ne.s32.totalorder %s115, %s116
      %p130 = scmp.eq.s32.totalorder %s42, 1
      %p131 = por %p129, %p130
      %p133 = scmp.ne.s32.totalorder %s116, %s132
      %p134 = scmp.eq.s32.totalorder %s42, 0
      %p135 = por %p133, %p134
      %s137 = sadd.s32 %s136, 1
      %p140 = scmp.eq.s32.totalorder %s36, 1
      %p141 = scmp.ne.s32.totalorder %s136, %s138
      %p142 = scmp.eq.s32.totalorder %s36, 0
      %p143 = por %p141, %p142
      %p144 = scmp.ne.s32.totalorder %s136, %s138
      %p145 = scmp.eq.s32.totalorder %s41, 1
      %p146 = por %p144, %p145
      %p147 = scmp.ne.s32.totalorder %s138, %s139
      %p148 = scmp.eq.s32.totalorder %s41, 0
      %p149 = por %p147, %p148
      %p150 = scmp.ne.s32.totalorder %s138, %s139
      %p151 = scmp.eq.s32.totalorder %s42, 1
      %p152 = por %p150, %p151
      %p154 = scmp.ne.s32.totalorder %s139, %s153
      %p155 = scmp.eq.s32.totalorder %s42, 0
      %p156 = por %p154, %p155
      %s158 = sadd.s32 %s157, 1
      %p161 = scmp.eq.s32.totalorder %s36, 1
      %p162 = scmp.ne.s32.totalorder %s157, %s159
      %p163 = scmp.eq.s32.totalorder %s36, 0
      %p164 = por %p162, %p163
      %p165 = scmp.ne.s32.totalorder %s157, %s159
      %p166 = scmp.eq.s32.totalorder %s41, 1
      %p167 = por %p165, %p166
      %p168 = scmp.ne.s32.totalorder %s159, %s160
      %p169 = scmp.eq.s32.totalorder %s41, 0
      %p170 = por %p168, %p169
      %p171 = scmp.ne.s32.totalorder %s159, %s160
      %p172 = scmp.eq.s32.totalorder %s42, 1
      %p173 = por %p171, %p172
      %p175 = scmp.ne.s32.totalorder %s160, %s174
      %p176 = scmp.eq.s32.totalorder %s42, 0
      %p177 = por %p175, %p176
      %s179 = sadd.s32 %s178, 1
      %p182 = scmp.eq.s32.totalorder %s36, 1
      %p183 = scmp.ne.s32.totalorder %s178, %s180
      %p184 = scmp.eq.s32.totalorder %s36, 0
      %p185 = por %p183, %p184
      %p186 = scmp.ne.s32.totalorder %s178, %s180
      %p187 = scmp.eq.s32.totalorder %s41, 1
      %p188 = por %p186, %p187
      %p189 = scmp.ne.s32.totalorder %s180, %s181
      %p190 = scmp.eq.s32.totalorder %s41, 0
      %p191 = por %p189, %p190
      %p192 = scmp.ne.s32.totalorder %s180, %s181
      %p193 = scmp.eq.s32.totalorder %s42, 1
      %p194 = por %p192, %p193
      %p196 = scmp.ne.s32.totalorder %s181, %s195
      %p197 = scmp.eq.s32.totalorder %s42, 0
      %p198 = por %p196, %p197
      %s200 = sadd.s32 %s199, 1
      %p203 = scmp.eq.s32.totalorder %s36, 1
      %p204 = scmp.ne.s32.totalorder %s199, %s201
      %p205 = scmp.eq.s32.totalorder %s36, 0
      %p206 = por %p204, %p205
      %p207 = scmp.ne.s32.totalorder %s199, %s201
      %p208 = scmp.eq.s32.totalorder %s41, 1
      %p209 = por %p207, %p208
      %p210 = scmp.ne.s32.totalorder %s201, %s202
      %p211 = scmp.eq.s32.totalorder %s41, 0
      %p212 = por %p210, %p211
      %p213 = scmp.ne.s32.totalorder %s201, %s202
      %p214 = scmp.eq.s32.totalorder %s42, 1
      %p215 = por %p213, %p214
      %p217 = scmp.ne.s32.totalorder %s202, %s216
      %p218 = scmp.eq.s32.totalorder %s42, 0
      %p219 = por %p217, %p218
      %s221 = sadd.s32 %s220, 1
      %p224 = scmp.eq.s32.totalorder %s36, 1
      %p225 = scmp.ne.s32.totalorder %s220, %s222
      %p226 = scmp.eq.s32.totalorder %s36, 0
      %p227 = por %p225, %p226
      %p228 = scmp.ne.s32.totalorder %s220, %s222
      %p229 = scmp.eq.s32.totalorder %s41, 1
      %p230 = por %p228, %p229
      %p231 = scmp.ne.s32.totalorder %s222, %s223
      %p232 = scmp.eq.s32.totalorder %s41, 0
      %p233 = por %p231, %p232
      %p234 = scmp.ne.s32.totalorder %s222, %s223
      %p235 = scmp.eq.s32.totalorder %s42, 1
      %p236 = por %p234, %p235
      %p238 = scmp.ne.s32.totalorder %s223, %s237
      %p239 = scmp.eq.s32.totalorder %s42, 0
      %p240 = por %p238, %p239
      %s242 = sadd.s32 %s241, 1
      %p245 = scmp.eq.s32.totalorder %s36, 1
      %p246 = scmp.ne.s32.totalorder %s241, %s243
      %p247 = scmp.eq.s32.totalorder %s36, 0
      %p248 = por %p246, %p247
      %p249 = scmp.ne.s32.totalorder %s241, %s243
      %p250 = scmp.eq.s32.totalorder %s41, 1
      %p251 = por %p249, %p250
      %p252 = scmp.ne.s32.totalorder %s243, %s244
      %p253 = scmp.eq.s32.totalorder %s41, 0
      %p254 = por %p252, %p253
      %p255 = scmp.ne.s32.totalorder %s243, %s244
      %p256 = scmp.eq.s32.totalorder %s42, 1
      %p257 = por %p255, %p256
      %p259 = scmp.ne.s32.totalorder %s244, %s258
      %p260 = scmp.eq.s32.totalorder %s42, 0
      %p261 = por %p259, %p260
      %s263 = sadd.s32 %s262, 1
      %p266 = scmp.eq.s32.totalorder %s36, 1
      %p267 = scmp.ne.s32.totalorder %s262, %s264
      %p268 = scmp.eq.s32.totalorder %s36, 0
      %p269 = por %p267, %p268
      %p270 = scmp.ne.s32.totalorder %s262, %s264
      %p271 = scmp.eq.s32.totalorder %s41, 1
      %p272 = por %p270, %p271
      %p273 = scmp.ne.s32.totalorder %s264, %s265
      %p274 = scmp.eq.s32.totalorder %s41, 0
      %p275 = por %p273, %p274
      %p276 = scmp.ne.s32.totalorder %s264, %s265
      %p277 = scmp.eq.s32.totalorder %s42, 1
      %p278 = por %p276, %p277
      %p280 = scmp.ne.s32.totalorder %s265, %s279
      %p281 = scmp.eq.s32.totalorder %s42, 0
      %p282 = por %p280, %p281
      %s284 = sadd.s32 %s283, 1
      %p287 = scmp.eq.s32.totalorder %s36, 1
      %p288 = scmp.ne.s32.totalorder %s283, %s285
      %p289 = scmp.eq.s32.totalorder %s36, 0
      %p290 = por %p288, %p289
      %p291 = scmp.ne.s32.totalorder %s283, %s285
      %p292 = scmp.eq.s32.totalorder %s41, 1
      %p293 = por %p291, %p292
      %p294 = scmp.ne.s32.totalorder %s285, %s286
      %p295 = scmp.eq.s32.totalorder %s41, 0
      %p296 = por %p294, %p295
      %p297 = scmp.ne.s32.totalorder %s285, %s286
      %p298 = scmp.eq.s32.totalorder %s42, 1
      %p299 = por %p297, %p298
      %p301 = scmp.ne.s32.totalorder %s286, %s300
      %p302 = scmp.eq.s32.totalorder %s42, 0
      %p303 = por %p301, %p302
      %s305 = sadd.s32 %s304, 1
      %p308 = scmp.eq.s32.totalorder %s36, 1
      %p309 = scmp.ne.s32.totalorder %s304, %s306
      %p310 = scmp.eq.s32.totalorder %s36, 0
      %p311 = por %p309, %p310
      %p312 = scmp.ne.s32.totalorder %s304, %s306
      %p313 = scmp.eq.s32.totalorder %s41, 1
      %p314 = por %p312, %p313
      %p315 = scmp.ne.s32.totalorder %s306, %s307
      %p316 = scmp.eq.s32.totalorder %s41, 0
      %p317 = por %p315, %p316
      %p318 = scmp.ne.s32.totalorder %s306, %s307
      %p319 = scmp.eq.s32.totalorder %s42, 1
      %p320 = por %p318, %p319
      %p322 = scmp.ne.s32.totalorder %s307, %s321
      %p323 = scmp.eq.s32.totalorder %s42, 0
      %p324 = por %p322, %p323
      %s326 = sadd.s32 %s325, 1
      %p329 = scmp.eq.s32.totalorder %s36, 1
      %p330 = scmp.ne.s32.totalorder %s325, %s327
      %p331 = scmp.eq.s32.totalorder %s36, 0
      %p332 = por %p330, %p331
      %p333 = scmp.ne.s32.totalorder %s325, %s327
      %p334 = scmp.eq.s32.totalorder %s41, 1
      %p335 = por %p333, %p334
      %p336 = scmp.ne.s32.totalorder %s327, %s328
      %p337 = scmp.eq.s32.totalorder %s41, 0
      %p338 = por %p336, %p337
      %p339 = scmp.ne.s32.totalorder %s327, %s328
      %p340 = scmp.eq.s32.totalorder %s42, 1
      %p341 = por %p339, %p340
      %p343 = scmp.ne.s32.totalorder %s328, %s342
      %p344 = scmp.eq.s32.totalorder %s42, 0
      %p345 = por %p343, %p344
      %s347 = sadd.s32 %s346, 1
      %p350 = scmp.eq.s32.totalorder %s36, 1
      %p351 = scmp.ne.s32.totalorder %s346, %s348
      %p352 = scmp.eq.s32.totalorder %s36, 0
      %p353 = por %p351, %p352
      %p354 = scmp.ne.s32.totalorder %s346, %s348
      %p355 = scmp.eq.s32.totalorder %s41, 1
      %p356 = por %p354, %p355
      %p357 = scmp.ne.s32.totalorder %s348, %s349
      %p358 = scmp.eq.s32.totalorder %s41, 0
      %p359 = por %p357, %p358
      %p360 = scmp.ne.s32.totalorder %s348, %s349
      %p361 = scmp.eq.s32.totalorder %s42, 1
      %p362 = por %p360, %p361
      %p364 = scmp.ne.s32.totalorder %s349, %s363
      %p365 = scmp.eq.s32.totalorder %s42, 0
      %p366 = por %p364, %p365
      %s368 = sadd.s32 %s367, 1
      %p371 = scmp.eq.s32.totalorder %s36, 1
      %p372 = scmp.ne.s32.totalorder %s367, %s369
      %p373 = scmp.eq.s32.totalorder %s36, 0
      %p374 = por %p372, %p373
      %p375 = scmp.ne.s32.totalorder %s367, %s369
      %p376 = scmp.eq.s32.totalorder %s41, 1
      %p377 = por %p375, %p376
      %p378 = scmp.ne.s32.totalorder %s369, %s370
      %p379 = scmp.eq.s32.totalorder %s41, 0
      %p380 = por %p378, %p379
      %p381 = scmp.ne.s32.totalorder %s369, %s370
      %p382 = scmp.eq.s32.totalorder %s42, 1
      %p383 = por %p381, %p382
      %p385 = scmp.ne.s32.totalorder %s370, %s384
      %p386 = scmp.eq.s32.totalorder %s42, 0
      %p387 = por %p385, %p386
      %s389 = sadd.s32 %s388, 1
      %p392 = scmp.eq.s32.totalorder %s36, 1
      %p393 = scmp.ne.s32.totalorder %s388, %s390
      %p394 = scmp.eq.s32.totalorder %s36, 0
      %p395 = por %p393, %p394
      %p396 = scmp.ne.s32.totalorder %s388, %s390
      %p397 = scmp.eq.s32.totalorder %s41, 1
      %p398 = por %p396, %p397
      %p399 = scmp.ne.s32.totalorder %s390, %s391
      %p400 = scmp.eq.s32.totalorder %s41, 0
      %p401 = por %p399, %p400
      %p402 = scmp.ne.s32.totalorder %s390, %s391
      %p403 = scmp.eq.s32.totalorder %s42, 1
      %p404 = por %p402, %p403
      %p406 = scmp.ne.s32.totalorder %s391, %s405
      %p407 = scmp.eq.s32.totalorder %s42, 0
      %p408 = por %p406, %p407
      %s410 = sadd.s32 %s409, 1
      %p413 = scmp.eq.s32.totalorder %s36, 1
      %p414 = scmp.ne.s32.totalorder %s409, %s411
      %p415 = scmp.eq.s32.totalorder %s36, 0
      %p416 = por %p414, %p415
      %p417 = scmp.ne.s32.totalorder %s409, %s411
      %p418 = scmp.eq.s32.totalorder %s41, 1
      %p419 = por %p417, %p418
      %p420 = scmp.ne.s32.totalorder %s411, %s412
      %p421 = scmp.eq.s32.totalorder %s41, 0
      %p422 = por %p420, %p421
      %p423 = scmp.ne.s32.totalorder %s411, %s412
      %p424 = scmp.eq.s32.totalorder %s42, 1
      %p425 = por %p423, %p424
      %p427 = scmp.ne.s32.totalorder %s412, %s426
      %p428 = scmp.eq.s32.totalorder %s42, 0
      %p429 = por %p427, %p428
      %s430 = ssub.s32 %s43, %s55
      %s431 = ssub.s32 %s44, %s51
      %s432 = sor.u32 %s430, %s431
      %p433 = scmp.eq.s32.totalorder %s432, 0
      %s435 = sadd.s32 %s434, 1
      %s436 = scalar_select %p433, %s434, %s435
      %p439 = pneg %p433
      %p440 = scmp.eq.s32.totalorder %s36, 1
      %p441 = por %p439, %p440
      %p442 = scmp.ne.s32.totalorder %s434, %s437
      %p443 = scmp.eq.s32.totalorder %s36, 0
      %p444 = por %p442, %p443
      %p445 = scmp.ne.s32.totalorder %s434, %s437
      %p446 = scmp.eq.s32.totalorder %s41, 1
      %p447 = por %p445, %p446
      %p448 = scmp.ne.s32.totalorder %s437, %s438
      %p449 = scmp.eq.s32.totalorder %s41, 0
      %p450 = por %p448, %p449
      %p451 = scmp.ne.s32.totalorder %s437, %s438
      %p452 = scmp.eq.s32.totalorder %s42, 1
      %p453 = por %p451, %p452
      %p455 = scmp.ne.s32.totalorder %s438, %s454
      %p456 = scmp.eq.s32.totalorder %s42, 0
      %p457 = por %p455, %p456
      %p458 = scmp.le.s32.totalorder 1, %s36
      %p459 = scmp.lt.s32.totalorder %s36, 3
      %p460 = pnand %p458, %p459
      %p461 = pneg %p460
      // Predicated region
      $region9: #{tpu_custom_call.1} parent=5 // pred_check
        _
      $region10: #{tpu_custom_call.1} parent=5 // pred_check_branch
        %463 = sbr.rel (%p460) target = $region12
      $region11: #{tpu_custom_call.1} parent=5 // pred_region
        %s464 = ssub.s32 %s36, 1
        // Predicated region
        $region13: #{tpu_custom_call.1} parent=11 // pred_check
          %p465 = pneg %p149
        $region14: #{tpu_custom_call.1} parent=11 // pred_check_branch
          %467 = sbr.rel (%p465) target = $region16
        $region15: #{tpu_custom_call.1} parent=11 // pred_region
          _
        $region16: #{tpu_custom_call.1} parent=11 // pred_fallthru
          _
        // Predicated region
        $region17: #{tpu_custom_call.1} parent=11 // pred_check
          %p468 = pneg %p170
        $region18: #{tpu_custom_call.1} parent=11 // pred_check_branch
          %470 = sbr.rel (%p468) target = $region20
        $region19: #{tpu_custom_call.1} parent=11 // pred_region
          _
        $region20: #{tpu_custom_call.1} parent=11 // pred_fallthru
          _
        // Predicated region
        $region21: #{tpu_custom_call.1} parent=11 // pred_check
          %p471 = pneg %p191
        $region22: #{tpu_custom_call.1} parent=11 // pred_check_branch
          %473 = sbr.rel (%p471) target = $region24
        $region23: #{tpu_custom_call.1} parent=11 // pred_region
          _
        $region24: #{tpu_custom_call.1} parent=11 // pred_fallthru
          _
        // Predicated region
        $region25: #{tpu_custom_call.1} parent=11 // pred_check
          %p474 = pneg %p212
        $region26: #{tpu_custom_call.1} parent=11 // pred_check_branch
          %476 = sbr.rel (%p474) target = $region28
        $region27: #{tpu_custom_call.1} parent=11 // pred_region
          %s478 = ssub.s32 16, 16
          %479 = vsyncadd [#allocation9], %s478
          %s481 = sshll.u32 [#allocation8], 4
          %s482 = int_to_ptr.vmem [resolvable:$true] %s481
          %484 = dma.hbm_to_vmem [thread:$0]  %s6, 16, %s482, [#allocation9]
        $region28: #{tpu_custom_call.1} parent=11 // pred_fallthru
          _
        // Predicated region
        $region29: #{tpu_custom_call.1} parent=11 // pred_check
          %p485 = pneg %p233
        $region30: #{tpu_custom_call.1} parent=11 // pred_check_branch
          %487 = sbr.rel (%p485) target = $region32
        $region31: #{tpu_custom_call.1} parent=11 // pred_region
          %s489 = ssub.s32 512, 512
          %490 = vsyncadd [#allocation9], %s489
          %s491 = sshll.u32 [#allocation10], 4
          %s492 = int_to_ptr.vmem [resolvable:$true] %s491
          %497 = dma.hbm_to_vmem [thread:$0]  %s7, 512, %s492, [#allocation9], 128, 128, 8
        $region32: #{tpu_custom_call.1} parent=11 // pred_fallthru
          _
        // Predicated region
        $region33: #{tpu_custom_call.1} parent=11 // pred_check
          %p498 = pneg %p254
        $region34: #{tpu_custom_call.1} parent=11 // pred_check_branch
          %500 = sbr.rel (%p498) target = $region36
        $region35: #{tpu_custom_call.1} parent=11 // pred_region
          %s502 = ssub.s32 16, 16
          %503 = vsyncadd [#allocation12], %s502
          %s505 = sshll.u32 [#allocation11], 4
          %s506 = int_to_ptr.vmem [resolvable:$true] %s505
          %508 = dma.hbm_to_vmem [thread:$0]  %s8, 16, %s506, [#allocation12]
        $region36: #{tpu_custom_call.1} parent=11 // pred_fallthru
          _
        // Predicated region
        $region37: #{tpu_custom_call.1} parent=11 // pred_check
          %p509 = pneg %p275
        $region38: #{tpu_custom_call.1} parent=11 // pred_check_branch
          %511 = sbr.rel (%p509) target = $region40
        $region39: #{tpu_custom_call.1} parent=11 // pred_region
          %s513 = ssub.s32 512, 512
          %514 = vsyncadd [#allocation12], %s513
          %s515 = sshll.u32 [#allocation13], 4
          %s516 = int_to_ptr.vmem [resolvable:$true] %s515
          %521 = dma.hbm_to_vmem [thread:$0]  %s9, 512, %s516, [#allocation12], 128, 128, 8
        $region40: #{tpu_custom_call.1} parent=11 // pred_fallthru
          _
        // Predicated region
        $region41: #{tpu_custom_call.1} parent=11 // pred_check
          %p522 = pneg %p296
        $region42: #{tpu_custom_call.1} parent=11 // pred_check_branch
          %524 = sbr.rel (%p522) target = $region44
        $region43: #{tpu_custom_call.1} parent=11 // pred_region
          %s526 = ssub.s32 16, 16
          %527 = vsyncadd [#allocation15], %s526
          %s529 = sshll.u32 [#allocation14], 4
          %s530 = int_to_ptr.vmem [resolvable:$true] %s529
          %532 = dma.hbm_to_vmem [thread:$0]  %s10, 16, %s530, [#allocation15]
        $region44: #{tpu_custom_call.1} parent=11 // pred_fallthru
          _
        // Predicated region
        $region45: #{tpu_custom_call.1} parent=11 // pred_check
          %p533 = pneg %p317
        $region46: #{tpu_custom_call.1} parent=11 // pred_check_branch
          %535 = sbr.rel (%p533) target = $region48
        $region47: #{tpu_custom_call.1} parent=11 // pred_region
          %s537 = ssub.s32 16, 16
          %538 = vsyncadd [#allocation15], %s537
          %s540 = sshll.u32 [#allocation16], 4
          %s541 = int_to_ptr.vmem [resolvable:$true] %s540
          %543 = dma.hbm_to_vmem [thread:$0]  %s11, 16, %s541, [#allocation15]
        $region48: #{tpu_custom_call.1} parent=11 // pred_fallthru
          _
        // Predicated region
        $region49: #{tpu_custom_call.1} parent=11 // pred_check
          %p544 = pneg %p338
        $region50: #{tpu_custom_call.1} parent=11 // pred_check_branch
          %546 = sbr.rel (%p544) target = $region52
        $region51: #{tpu_custom_call.1} parent=11 // pred_region
          _
        $region52: #{tpu_custom_call.1} parent=11 // pred_fallthru
          _
        // Predicated region
        $region53: #{tpu_custom_call.1} parent=11 // pred_check
          %p547 = pneg %p359
        $region54: #{tpu_custom_call.1} parent=11 // pred_check_branch
          %549 = sbr.rel (%p547) target = $region56
        $region55: #{tpu_custom_call.1} parent=11 // pred_region
          %s551 = ssub.s32 16, 16
          %552 = vsyncadd [#allocation18], %s551
          %s554 = sshll.u32 [#allocation17], 4
          %s555 = int_to_ptr.vmem [resolvable:$true] %s554
          %557 = dma.hbm_to_vmem [thread:$0]  %s13, 16, %s555, [#allocation18]
        $region56: #{tpu_custom_call.1} parent=11 // pred_fallthru
          _
        // Predicated region
        $region57: #{tpu_custom_call.1} parent=11 // pred_check
          %p558 = pneg %p380
        $region58: #{tpu_custom_call.1} parent=11 // pred_check_branch
          %560 = sbr.rel (%p558) target = $region60
        $region59: #{tpu_custom_call.1} parent=11 // pred_region
          _
        $region60: #{tpu_custom_call.1} parent=11 // pred_fallthru
          _
        // Predicated region
        $region61: #{tpu_custom_call.1} parent=11 // pred_check
          %p561 = pneg %p401
        $region62: #{tpu_custom_call.1} parent=11 // pred_check_branch
          %563 = sbr.rel (%p561) target = $region64
        $region63: #{tpu_custom_call.1} parent=11 // pred_region
          _
        $region64: #{tpu_custom_call.1} parent=11 // pred_fallthru
          _
        // Predicated region
        $region65: #{tpu_custom_call.1} parent=11 // pred_check
          %p564 = pneg %p422
        $region66: #{tpu_custom_call.1} parent=11 // pred_check_branch
          %566 = sbr.rel (%p564) target = $region68
        $region67: #{tpu_custom_call.1} parent=11 // pred_region
          _
        $region68: #{tpu_custom_call.1} parent=11 // pred_fallthru
          _
      $region12: #{tpu_custom_call.1} parent=5 // pred_fallthru
        _
      %p567 = scmp.lt.s32.totalorder %s36, 2
      // Predicated region
      $region69: #{tpu_custom_call.1} parent=5 // pred_check
        %p568 = pneg %p567
      $region70: #{tpu_custom_call.1} parent=5 // pred_check_branch
        %570 = sbr.rel (%p568) target = $region72
      $region71: #{tpu_custom_call.1} parent=5 // pred_region
        // Predicated region
        $region73: #{tpu_custom_call.1} parent=71 // pred_check
          %p571 = pneg %p70
        $region74: #{tpu_custom_call.1} parent=71 // pred_check_branch
          %573 = sbr.rel (%p571) target = $region76
        $region75: #{tpu_custom_call.1} parent=71 // pred_region
          %s574 = sand.u32 %s60, 1
          %s575 = scalar_lea.sflag [#allocation3], %s574
          %s576 = sand.u32 %s60, 1
          %s577 = smul.addr %s576, 8
          %s578 = scalar_lea.vmem [#allocation2], %s577
          %s580 = ssub.s32 128, 128
          %581 = vsyncadd %s575, %s580
          %s582 = sadd.s32 %s44, %s43
          %s583 = smul.addr %s582, 128
          %s584 = scalar_lea.hbm %s0, %s583
          %s586 = sshll.u32 %s578, 4
          %s587 = int_to_ptr.vmem [resolvable:$true] %s586
          %589 = dma.hbm_to_vmem [thread:$0]  %s584, 128, %s587, %s575
        $region76: #{tpu_custom_call.1} parent=71 // pred_fallthru
          _
        // Predicated region
        $region77: #{tpu_custom_call.1} parent=71 // pred_check
          %p590 = pneg %p96
        $region78: #{tpu_custom_call.1} parent=71 // pred_check_branch
          %592 = sbr.rel (%p590) target = $region80
        $region79: #{tpu_custom_call.1} parent=71 // pred_region
          %s593 = sand.u32 %s36, 1
          %s594 = scalar_lea.sflag [#allocation6], %s593
          %s595 = sand.u32 %s86, 1
          %s596 = smul.addr %s595, 8
          %s597 = scalar_lea.vmem [#allocation5], %s596
          %s599 = ssub.s32 128, 128
          %600 = vsyncadd %s594, %s599
          %s601 = smul.addr %s43, 128
          %s602 = scalar_lea.hbm %s1, %s601
          %s604 = sshll.u32 %s597, 4
          %s605 = int_to_ptr.vmem [resolvable:$true] %s604
          %607 = dma.hbm_to_vmem [thread:$0]  %s602, 128, %s605, %s594
        $region80: #{tpu_custom_call.1} parent=71 // pred_fallthru
          _
        // Predicated region
        $region81: #{tpu_custom_call.1} parent=71 // pred_check
          %p608 = pneg %p122
        $region82: #{tpu_custom_call.1} parent=71 // pred_check_branch
          %610 = sbr.rel (%p608) target = $region84
        $region83: #{tpu_custom_call.1} parent=71 // pred_region
          %s611 = sand.u32 %s36, 1
          %s612 = scalar_lea.sflag [#allocation6], %s611
          %s613 = sand.u32 %s112, 1
          %s614 = smul.addr %s613, 8
          %s615 = scalar_lea.vmem [#allocation7], %s614
          %s617 = ssub.s32 128, 128
          %618 = vsyncadd %s612, %s617
          %s619 = smul.addr %s43, 128
          %s620 = scalar_lea.hbm %s2, %s619
          %s622 = sshll.u32 %s615, 4
          %s623 = int_to_ptr.vmem [resolvable:$true] %s622
          %625 = dma.hbm_to_vmem [thread:$0]  %s620, 128, %s623, %s612
        $region84: #{tpu_custom_call.1} parent=71 // pred_fallthru
          _
      $region72: #{tpu_custom_call.1} parent=5 // pred_fallthru
        _
      %p626 = scmp.le.s32.totalorder 1, %s36
      %p627 = scmp.lt.s32.totalorder %s36, 3
      %p628 = pnand %p626, %p627
      %p629 = pneg %p628
      // Predicated region
      $region85: #{tpu_custom_call.1} parent=5 // pred_check
        _
      $region86: #{tpu_custom_call.1} parent=5 // pred_check_branch
        %631 = sbr.rel (%p628) target = $region88
      $region87: #{tpu_custom_call.1} parent=5 // pred_region
        %s632 = ssub.s32 %s36, 1
        %s633 = sand.u32 %s63, 1
        %s634 = scalar_lea.sflag [#allocation3], %s633
        %s635 = sand.u32 %s63, 1
        %s636 = smul.addr %s635, 8
        %s637 = scalar_lea.vmem [#allocation2], %s636
        // Predicated region
        $region89: #{tpu_custom_call.1} parent=87 // pred_check
          %p638 = pneg %p76
        $region90: #{tpu_custom_call.1} parent=87 // pred_check_branch
          %640 = sbr.rel (%p638) target = $region92
        $region91: #{tpu_custom_call.1} parent=87 // pred_region
          %641 = dma.done %s634, 128
        $region92: #{tpu_custom_call.1} parent=87 // pred_fallthru
          _
        %s642 = sand.u32 %s41, 1
        %s643 = scalar_lea.sflag [#allocation6], %s642
        %s644 = sand.u32 %s89, 1
        %s645 = smul.addr %s644, 8
        %s646 = scalar_lea.vmem [#allocation5], %s645
        // Predicated region
        $region93: #{tpu_custom_call.1} parent=87 // pred_check
          %p647 = pneg %p102
        $region94: #{tpu_custom_call.1} parent=87 // pred_check_branch
          %649 = sbr.rel (%p647) target = $region96
        $region95: #{tpu_custom_call.1} parent=87 // pred_region
          %650 = dma.done %s643, 128
        $region96: #{tpu_custom_call.1} parent=87 // pred_fallthru
          _
        %s651 = sand.u32 %s41, 1
        %s652 = scalar_lea.sflag [#allocation6], %s651
        %s653 = sand.u32 %s115, 1
        %s654 = smul.addr %s653, 8
        %s655 = scalar_lea.vmem [#allocation7], %s654
        // Predicated region
        $region97: #{tpu_custom_call.1} parent=87 // pred_check
          %p656 = pneg %p128
        $region98: #{tpu_custom_call.1} parent=87 // pred_check_branch
          %658 = sbr.rel (%p656) target = $region100
        $region99: #{tpu_custom_call.1} parent=87 // pred_region
          %659 = dma.done %s652, 128
        $region100: #{tpu_custom_call.1} parent=87 // pred_fallthru
          _
        // Predicated region
        $region101: #{tpu_custom_call.1} parent=87 // pred_check
          %p660 = pneg %p212
        $region102: #{tpu_custom_call.1} parent=87 // pred_check_branch
          %662 = sbr.rel (%p660) target = $region104
        $region103: #{tpu_custom_call.1} parent=87 // pred_region
          %663 = dma.done [#allocation9], 16
        $region104: #{tpu_custom_call.1} parent=87 // pred_fallthru
          _
        // Predicated region
        $region105: #{tpu_custom_call.1} parent=87 // pred_check
          %p664 = pneg %p233
        $region106: #{tpu_custom_call.1} parent=87 // pred_check_branch
          %666 = sbr.rel (%p664) target = $region108
        $region107: #{tpu_custom_call.1} parent=87 // pred_region
          %667 = dma.done [#allocation9], 512
        $region108: #{tpu_custom_call.1} parent=87 // pred_fallthru
          _
        // Predicated region
        $region109: #{tpu_custom_call.1} parent=87 // pred_check
          %p668 = pneg %p254
        $region110: #{tpu_custom_call.1} parent=87 // pred_check_branch
          %670 = sbr.rel (%p668) target = $region112
        $region111: #{tpu_custom_call.1} parent=87 // pred_region
          %671 = dma.done [#allocation12], 16
        $region112: #{tpu_custom_call.1} parent=87 // pred_fallthru
          _
        // Predicated region
        $region113: #{tpu_custom_call.1} parent=87 // pred_check
          %p672 = pneg %p275
        $region114: #{tpu_custom_call.1} parent=87 // pred_check_branch
          %674 = sbr.rel (%p672) target = $region116
        $region115: #{tpu_custom_call.1} parent=87 // pred_region
          %675 = dma.done [#allocation12], 512
        $region116: #{tpu_custom_call.1} parent=87 // pred_fallthru
          _
        // Predicated region
        $region117: #{tpu_custom_call.1} parent=87 // pred_check
          %p676 = pneg %p296
        $region118: #{tpu_custom_call.1} parent=87 // pred_check_branch
          %678 = sbr.rel (%p676) target = $region120
        $region119: #{tpu_custom_call.1} parent=87 // pred_region
          %679 = dma.done [#allocation15], 16
        $region120: #{tpu_custom_call.1} parent=87 // pred_fallthru
          _
        // Predicated region
        $region121: #{tpu_custom_call.1} parent=87 // pred_check
          %p680 = pneg %p317
        $region122: #{tpu_custom_call.1} parent=87 // pred_check_branch
          %682 = sbr.rel (%p680) target = $region124
        $region123: #{tpu_custom_call.1} parent=87 // pred_region
          %683 = dma.done [#allocation15], 16
        $region124: #{tpu_custom_call.1} parent=87 // pred_fallthru
          _
        // Predicated region
        $region125: #{tpu_custom_call.1} parent=87 // pred_check
          %p684 = pneg %p359
        $region126: #{tpu_custom_call.1} parent=87 // pred_check_branch
          %686 = sbr.rel (%p684) target = $region128
        $region127: #{tpu_custom_call.1} parent=87 // pred_region
          %687 = dma.done [#allocation18], 16
        $region128: #{tpu_custom_call.1} parent=87 // pred_fallthru
          _
        %s688 = sand.u32 %s63, 1
        %s689 = scalar_lea.sflag [#allocation3], %s688
        %s690 = sand.u32 %s63, 1
        %s691 = smul.addr %s690, 8
        %s692 = scalar_lea.vmem [#allocation2], %s691
        %p693 = pneg %p76
        %p694 = pneg %p73
        %s695 = sand.u32 %s41, 1
        %s696 = scalar_lea.sflag [#allocation6], %s695
        %s697 = sand.u32 %s89, 1
        %s698 = smul.addr %s697, 8
        %s699 = scalar_lea.vmem [#allocation5], %s698
        %p700 = pneg %p102
        %p701 = pneg %p99
        %s702 = sand.u32 %s41, 1
        %s703 = scalar_lea.sflag [#allocation6], %s702
        %s704 = sand.u32 %s115, 1
        %s705 = smul.addr %s704, 8
        %s706 = scalar_lea.vmem [#allocation7], %s705
        %p707 = pneg %p128
        %p708 = pneg %p125
        %p709 = pneg %p149
        %p710 = pneg %p146
        %p711 = pneg %p170
        %p712 = pneg %p167
        %p713 = pneg %p191
        %p714 = pneg %p188
        %p715 = pneg %p212
        %p716 = pneg %p209
        %p717 = pneg %p233
        %p718 = pneg %p230
        %p719 = pneg %p254
        %p720 = pneg %p251
        %p721 = pneg %p275
        %p722 = pneg %p272
        %p723 = pneg %p296
        %p724 = pneg %p293
        %p725 = pneg %p317
        %p726 = pneg %p314
        %p727 = pneg %p338
        %p728 = pneg %p335
        %p729 = pneg %p359
        %p730 = pneg %p356
        %p731 = pneg %p380
        %p732 = pneg %p377
        %p733 = pneg %p401
        %p734 = pneg %p398
        %p735 = pneg %p422
        %p736 = pneg %p419
        %p737 = pneg %p450
        %p738 = pneg %p447
        %s739 = sand.u32 %s437, 1
        %s740 = scalar_lea.sflag [#allocation4], %s739
        %s741 = sand.u32 %s437, 1
        %s742 = smul.addr %s741, 8
        %s743 = scalar_lea.vmem [#allocation19], %s742
        %v744 = vld [vmem:[%s637] sm:$0xff]
        %v745 = vld [vmem:[%s646] sm:$0xff]
        %v746 = vld [vmem:[%s655] sm:$0xff]
        %v747 = vld [vmem:[%s3] sm:$0xff]
        %v748 = vld [vmem:[%s3 + $0x8] sm:$0xff]
        %v749 = vld [vmem:[%s3 + $0x10] sm:$0xff]
        %v750 = vld [vmem:[%s3 + $0x18] sm:$0xff]
        %v751 = vld [vmem:[%s4] sm:$0x1]
        %v753 = vlaneseq
        %v754 = vshrl.u32 %v753, 7
        %v755 = vsub.s32 0, %v754
        %v756 = vrot.slane %v751, %v755
        %vm758 = vcmask 261120
        %v760 = vsel %vm758, %v744, 0
        %762 = vmatprep.subr.mxu0 0.0
        %763 = vmatpush1.msra.mxu0 %v747
        %764 = vmatprep.subr.mxu0 0.0
        %765 = vmatpush1.msra.mxu0 %v748
        %766 = vmatprep.subr.mxu0 0.0
        %767 = vmatpush1.msra.mxu0 %v749
        %768 = vmatprep.subr.mxu0 0.0
        %769 = vmatpush1.msra.mxu0 %v750
        %770 = vmatprep.subr.mxu0 0.0
        %771 = vmatpush1.msra.mxu0 0.0
        %772 = vmatprep.subr.mxu0 0.0
        %773 = vmatpush1.msra.mxu0 0.0
        %774 = vmatprep.subr.mxu0 0.0
        %775 = vmatpush1.msra.mxu0 0.0
        %776 = vmatprep.subr.mxu0 0.0
        %777 = vmatpush1.msra.mxu0 0.0
        %778 = vmatprep.subr.mxu0 0.0
        %779 = vmatpush1.msra.mxu0 0.0
        %780 = vmatprep.subr.mxu0 0.0
        %781 = vmatpush1.msra.mxu0 0.0
        %782 = vmatprep.subr.mxu0 0.0
        %783 = vmatpush1.msra.mxu0 0.0
        %784 = vmatprep.subr.mxu0 0.0
        %785 = vmatpush1.msra.mxu0 0.0
        %786 = vmatprep.subr.mxu0 0.0
        %787 = vmatpush1.msra.mxu0 0.0
        %788 = vmatprep.subr.mxu0 0.0
        %789 = vmatpush1.msra.mxu0 0.0
        %790 = vmatprep.subr.mxu0 0.0
        %791 = vmatpush1.msra.mxu0 0.0
        %792 = vmatprep.subr.mxu0 0.0
        %793 = vmatpush1.msra.mxu0 0.0
        %794 = vmatprep.subr.mxu0 0.0
        %795 = vmatpush1.msra.mxu0 0.0
        %796 = vmatprep.subr.mxu0 0.0
        %797 = vmatpush1.msra.mxu0 0.0
        %798 = vmatprep.subr.mxu0 0.0
        %799 = vmatpush1.msra.mxu0 0.0
        %800 = vmatprep.subr.mxu0 0.0
        %801 = vmatpush1.msra.mxu0 0.0
        %802 = vmatprep.subr.mxu0 0.0
        %803 = vmatpush1.msra.mxu0 0.0
        %804 = vmatprep.subr.mxu0 0.0
        %805 = vmatpush1.msra.mxu0 0.0
        %806 = vmatprep.subr.mxu0 0.0
        %807 = vmatpush1.msra.mxu0 0.0
        %808 = vmatprep.subr.mxu0 0.0
        %809 = vmatpush1.msra.mxu0 0.0
        %810 = vmatprep.subr.mxu0 0.0
        %811 = vmatpush1.msra.mxu0 0.0
        %812 = vmatprep.subr.mxu0 0.0
        %813 = vmatpush1.msra.mxu0 0.0
        %814 = vmatprep.subr.mxu0 0.0
        %815 = vmatpush1.msra.mxu0 0.0
        %816 = vmatprep.subr.mxu0 0.0
        %817 = vmatpush1.msra.mxu0 0.0
        %818 = vmatprep.subr.mxu0 0.0
        %819 = vmatpush1.msra.mxu0 0.0
        %820 = vmatprep.subr.mxu0 0.0
        %821 = vmatpush1.msra.mxu0 0.0
        %822 = vmatprep.subr.mxu0 0.0
        %823 = vmatpush1.msra.mxu0 0.0
        %824 = vmatprep.subr.mxu0 0.0
        %825 = vmatpush1.msra.mxu0 0.0
        %826 = vmatprep.mubr.f32.mxu0 0.0
        %827 = vmatmul.mubr.f32.gmra.mrb[0].mxu0 %v760
        %v828 = vpop.f32.mrb[0].mxu0
        %v829 = vadd.f32 %v756, %v828
        %v830 = vpop.f32.mrb[0].mxu0
        %831 = vdwg.mxu0
        %v832 = vld [vmem:[%s5] sm:$0xff]
        %v833 = vld [vmem:[%s5 + $0x8] sm:$0xff]
        %v834 = vld [vmem:[%s5 + $0x10] sm:$0xff]
        %v835 = vld [vmem:[%s5 + $0x18] sm:$0xff]
        %v836 = vld [vmem:[#allocation8] sm:$0x1]
        %v838 = vlaneseq
        %v839 = vshrl.u32 %v838, 7
        %v840 = vsub.s32 0, %v839
        %v841 = vrot.slane %v836, %v840
        %v844 = vsel %vm758, %v745, 0
        %846 = vmatprep.subr.mxu0 0.0
        %847 = vmatpush1.msra.mxu0 %v832
        %848 = vmatprep.subr.mxu0 0.0
        %849 = vmatpush1.msra.mxu0 %v833
        %850 = vmatprep.subr.mxu0 0.0
        %851 = vmatpush1.msra.mxu0 %v834
        %852 = vmatprep.subr.mxu0 0.0
        %853 = vmatpush1.msra.mxu0 %v835
        %854 = vmatprep.subr.mxu0 0.0
        %855 = vmatpush1.msra.mxu0 0.0
        %856 = vmatprep.subr.mxu0 0.0
        %857 = vmatpush1.msra.mxu0 0.0
        %858 = vmatprep.subr.mxu0 0.0
        %859 = vmatpush1.msra.mxu0 0.0
        %860 = vmatprep.subr.mxu0 0.0
        %861 = vmatpush1.msra.mxu0 0.0
        %862 = vmatprep.subr.mxu0 0.0
        %863 = vmatpush1.msra.mxu0 0.0
        %864 = vmatprep.subr.mxu0 0.0
        %865 = vmatpush1.msra.mxu0 0.0
        %866 = vmatprep.subr.mxu0 0.0
        %867 = vmatpush1.msra.mxu0 0.0
        %868 = vmatprep.subr.mxu0 0.0
        %869 = vmatpush1.msra.mxu0 0.0
        %870 = vmatprep.subr.mxu0 0.0
        %871 = vmatpush1.msra.mxu0 0.0
        %872 = vmatprep.subr.mxu0 0.0
        %873 = vmatpush1.msra.mxu0 0.0
        %874 = vmatprep.subr.mxu0 0.0
        %875 = vmatpush1.msra.mxu0 0.0
        %876 = vmatprep.subr.mxu0 0.0
        %877 = vmatpush1.msra.mxu0 0.0
        %878 = vmatprep.subr.mxu0 0.0
        %879 = vmatpush1.msra.mxu0 0.0
        %880 = vmatprep.subr.mxu0 0.0
        %881 = vmatpush1.msra.mxu0 0.0
        %882 = vmatprep.subr.mxu0 0.0
        %883 = vmatpush1.msra.mxu0 0.0
        %884 = vmatprep.subr.mxu0 0.0
        %885 = vmatpush1.msra.mxu0 0.0
        %886 = vmatprep.subr.mxu0 0.0
        %887 = vmatpush1.msra.mxu0 0.0
        %888 = vmatprep.subr.mxu0 0.0
        %889 = vmatpush1.msra.mxu0 0.0
        %890 = vmatprep.subr.mxu0 0.0
        %891 = vmatpush1.msra.mxu0 0.0
        %892 = vmatprep.subr.mxu0 0.0
        %893 = vmatpush1.msra.mxu0 0.0
        %894 = vmatprep.subr.mxu0 0.0
        %895 = vmatpush1.msra.mxu0 0.0
        %896 = vmatprep.subr.mxu0 0.0
        %897 = vmatpush1.msra.mxu0 0.0
        %898 = vmatprep.subr.mxu0 0.0
        %899 = vmatpush1.msra.mxu0 0.0
        %900 = vmatprep.subr.mxu0 0.0
        %901 = vmatpush1.msra.mxu0 0.0
        %902 = vmatprep.subr.mxu0 0.0
        %903 = vmatpush1.msra.mxu0 0.0
        %904 = vmatprep.subr.mxu0 0.0
        %905 = vmatpush1.msra.mxu0 0.0
        %906 = vmatprep.subr.mxu0 0.0
        %907 = vmatpush1.msra.mxu0 0.0
        %908 = vmatprep.subr.mxu0 0.0
        %909 = vmatpush1.msra.mxu0 0.0
        %910 = vmatprep.mubr.f32.mxu0 0.0
        %911 = vmatmul.mubr.f32.gmra.mrb[0].mxu0 %v844
        %v912 = vpop.f32.mrb[0].mxu0
        %v913 = vadd.f32 %v841, %v912
        %v914 = vpop.f32.mrb[0].mxu0
        %915 = vdwg.mxu0
        %v916 = vld [vmem:[#allocation10] sm:$0xff]
        %v917 = vld [vmem:[#allocation10 + $0x8] sm:$0xff]
        %v918 = vld [vmem:[#allocation10 + $0x10] sm:$0xff]
        %v919 = vld [vmem:[#allocation10 + $0x18] sm:$0xff]
        %v920 = vld [vmem:[#allocation11] sm:$0x1]
        %v922 = vlaneseq
        %v923 = vshrl.u32 %v922, 7
        %v924 = vsub.s32 0, %v923
        %v925 = vrot.slane %v920, %v924
        %v928 = vsel %vm758, %v746, 0
        %930 = vmatprep.subr.mxu0 0.0
        %931 = vmatpush1.msra.mxu0 %v916
        %932 = vmatprep.subr.mxu0 0.0
        %933 = vmatpush1.msra.mxu0 %v917
        %934 = vmatprep.subr.mxu0 0.0
        %935 = vmatpush1.msra.mxu0 %v918
        %936 = vmatprep.subr.mxu0 0.0
        %937 = vmatpush1.msra.mxu0 %v919
        %938 = vmatprep.subr.mxu0 0.0
        %939 = vmatpush1.msra.mxu0 0.0
        %940 = vmatprep.subr.mxu0 0.0
        %941 = vmatpush1.msra.mxu0 0.0
        %942 = vmatprep.subr.mxu0 0.0
        %943 = vmatpush1.msra.mxu0 0.0
        %944 = vmatprep.subr.mxu0 0.0
        %945 = vmatpush1.msra.mxu0 0.0
        %946 = vmatprep.subr.mxu0 0.0
        %947 = vmatpush1.msra.mxu0 0.0
        %948 = vmatprep.subr.mxu0 0.0
        %949 = vmatpush1.msra.mxu0 0.0
        %950 = vmatprep.subr.mxu0 0.0
        %951 = vmatpush1.msra.mxu0 0.0
        %952 = vmatprep.subr.mxu0 0.0
        %953 = vmatpush1.msra.mxu0 0.0
        %954 = vmatprep.subr.mxu0 0.0
        %955 = vmatpush1.msra.mxu0 0.0
        %956 = vmatprep.subr.mxu0 0.0
        %957 = vmatpush1.msra.mxu0 0.0
        %958 = vmatprep.subr.mxu0 0.0
        %959 = vmatpush1.msra.mxu0 0.0
        %960 = vmatprep.subr.mxu0 0.0
        %961 = vmatpush1.msra.mxu0 0.0
        %962 = vmatprep.subr.mxu0 0.0
        %963 = vmatpush1.msra.mxu0 0.0
        %964 = vmatprep.subr.mxu0 0.0
        %965 = vmatpush1.msra.mxu0 0.0
        %966 = vmatprep.subr.mxu0 0.0
        %967 = vmatpush1.msra.mxu0 0.0
        %968 = vmatprep.subr.mxu0 0.0
        %969 = vmatpush1.msra.mxu0 0.0
        %970 = vmatprep.subr.mxu0 0.0
        %971 = vmatpush1.msra.mxu0 0.0
        %972 = vmatprep.subr.mxu0 0.0
        %973 = vmatpush1.msra.mxu0 0.0
        %974 = vmatprep.subr.mxu0 0.0
        %975 = vmatpush1.msra.mxu0 0.0
        %976 = vmatprep.subr.mxu0 0.0
        %977 = vmatpush1.msra.mxu0 0.0
        %978 = vmatprep.subr.mxu0 0.0
        %979 = vmatpush1.msra.mxu0 0.0
        %980 = vmatprep.subr.mxu0 0.0
        %981 = vmatpush1.msra.mxu0 0.0
        %982 = vmatprep.subr.mxu0 0.0
        %983 = vmatpush1.msra.mxu0 0.0
        %984 = vmatprep.subr.mxu0 0.0
        %985 = vmatpush1.msra.mxu0 0.0
        %986 = vmatprep.subr.mxu0 0.0
        %987 = vmatpush1.msra.mxu0 0.0
        %988 = vmatprep.subr.mxu0 0.0
        %989 = vmatpush1.msra.mxu0 0.0
        %990 = vmatprep.subr.mxu0 0.0
        %991 = vmatpush1.msra.mxu0 0.0
        %992 = vmatprep.subr.mxu0 0.0
        %993 = vmatpush1.msra.mxu0 0.0
        %994 = vmatprep.mubr.f32.mxu0 0.0
        %995 = vmatmul.mubr.f32.gmra.mrb[0].mxu0 %v928
        %v996 = vpop.f32.mrb[0].mxu0
        %v997 = vadd.f32 %v925, %v996
        %v998 = vpop.f32.mrb[0].mxu0
        %999 = vdwg.mxu0
        %vm1000 = vcmask 64512
        %v1002 = vsel %vm1000, %v829, 0
        %v1005 = vsel %vm1000, %v913, 0
        %1007 = vmatprep.subr.mxu0 0.0
        %1008 = vmatpush1.xpose.msra.mxu0 %v1005
        %1009 = vmatprep.subr.mxu0 0.0
        %1010 = vmatpush1.xpose.msra.mxu0 0.0
        %1011 = vmatprep.subr.mxu0 0.0
        %1012 = vmatpush1.xpose.msra.mxu0 0.0
        %1013 = vmatprep.subr.mxu0 0.0
        %1014 = vmatpush1.xpose.msra.mxu0 0.0
        %1015 = vmatprep.subr.mxu0 0.0
        %1016 = vmatpush1.xpose.msra.mxu0 0.0
        %1017 = vmatprep.subr.mxu0 0.0
        %1018 = vmatpush1.xpose.msra.mxu0 0.0
        %1019 = vmatprep.subr.mxu0 0.0
        %1020 = vmatpush1.xpose.msra.mxu0 0.0
        %1021 = vmatprep.subr.mxu0 0.0
        %1022 = vmatpush1.xpose.msra.mxu0 0.0
        %1023 = vmatprep.subr.mxu0 0.0
        %1024 = vmatpush1.xpose.msra.mxu0 0.0
        %1025 = vmatprep.subr.mxu0 0.0
        %1026 = vmatpush1.xpose.msra.mxu0 0.0
        %1027 = vmatprep.subr.mxu0 0.0
        %1028 = vmatpush1.xpose.msra.mxu0 0.0
        %1029 = vmatprep.subr.mxu0 0.0
        %1030 = vmatpush1.xpose.msra.mxu0 0.0
        %1031 = vmatprep.subr.mxu0 0.0
        %1032 = vmatpush1.xpose.msra.mxu0 0.0
        %1033 = vmatprep.subr.mxu0 0.0
        %1034 = vmatpush1.xpose.msra.mxu0 0.0
        %1035 = vmatprep.subr.mxu0 0.0
        %1036 = vmatpush1.xpose.msra.mxu0 0.0
        %1037 = vmatprep.subr.mxu0 0.0
        %1038 = vmatpush1.xpose.msra.mxu0 0.0
        %1039 = vmatprep.subr.mxu0 0.0
        %1040 = vmatpush1.xpose.msra.mxu0 0.0
        %1041 = vmatprep.subr.mxu0 0.0
        %1042 = vmatpush1.xpose.msra.mxu0 0.0
        %1043 = vmatprep.subr.mxu0 0.0
        %1044 = vmatpush1.xpose.msra.mxu0 0.0
        %1045 = vmatprep.subr.mxu0 0.0
        %1046 = vmatpush1.xpose.msra.mxu0 0.0
        %1047 = vmatprep.subr.mxu0 0.0
        %1048 = vmatpush1.xpose.msra.mxu0 0.0
        %1049 = vmatprep.subr.mxu0 0.0
        %1050 = vmatpush1.xpose.msra.mxu0 0.0
        %1051 = vmatprep.subr.mxu0 0.0
        %1052 = vmatpush1.xpose.msra.mxu0 0.0
        %1053 = vmatprep.subr.mxu0 0.0
        %1054 = vmatpush1.xpose.msra.mxu0 0.0
        %1055 = vmatprep.subr.mxu0 0.0
        %1056 = vmatpush1.xpose.msra.mxu0 0.0
        %1057 = vmatprep.subr.mxu0 0.0
        %1058 = vmatpush1.xpose.msra.mxu0 0.0
        %1059 = vmatprep.subr.mxu0 0.0
        %1060 = vmatpush1.xpose.msra.mxu0 0.0
        %1061 = vmatprep.subr.mxu0 0.0
        %1062 = vmatpush1.xpose.msra.mxu0 0.0
        %1063 = vmatprep.subr.mxu0 0.0
        %1064 = vmatpush1.xpose.msra.mxu0 0.0
        %1065 = vmatprep.subr.mxu0 0.0
        %1066 = vmatpush1.xpose.msra.mxu0 0.0
        %1067 = vmatprep.subr.mxu0 0.0
        %1068 = vmatpush1.xpose.msra.mxu0 0.0
        %1069 = vmatprep.subr.mxu0 0.0
        %1070 = vmatpush1.xpose.msra.mxu0 0.0
        %1071 = vmatprep.mubr.f32.mxu0 0.0
        %1072 = vmatmul.mubr.f32.gmra.mrb[0].mxu0 %v1002
        %v1073 = vpop.f32.mrb[0].mxu0
        %v1074 = vadd.f32 0.0, %v1073
        %v1075 = vpop.f32.mrb[0].mxu0
        %1076 = vdwg.mxu0
        %v1077 = vmul.f32 %v1074, 0.17677669
        %v1078 = vsel %vm1000, %v1077, -inf
        %1079 = vmax.xlane.f32.xlu0 %v1078
        %v1080 = vpop.xlane.xlu0 %1079
        %v1081 = vsub.f32 %v1077, %v1080
        %v1082 = vmul.f32 %v1081, 1.442695
        %v1083 = vpow.pop %v1082
        %v1084 = vsel %vm1000, %v1083, 0.0
        %1085 = vadd.xlane.f32.xlu0 %v1084
        %v1086 = vpop.xlane.xlu0 %1085
        %v1087 = vrcp.pop %v1086
        %v1088 = vmul.f32 %v1083, %v1087
        %v1090 = vsel %vm1000, %v1088, 0
        %1092 = vmatprep.subr.mxu0 0.0
        %1093 = vmatpush1.msra.mxu0 %v997
        %1094 = vmatprep.subr.mxu0 0.0
        %1095 = vmatpush1.msra.mxu0 0.0
        %1096 = vmatprep.subr.mxu0 0.0
        %1097 = vmatpush1.msra.mxu0 0.0
        %1098 = vmatprep.subr.mxu0 0.0
        %1099 = vmatpush1.msra.mxu0 0.0
        %1100 = vmatprep.subr.mxu0 0.0
        %1101 = vmatpush1.msra.mxu0 0.0
        %1102 = vmatprep.subr.mxu0 0.0
        %1103 = vmatpush1.msra.mxu0 0.0
        %1104 = vmatprep.subr.mxu0 0.0
        %1105 = vmatpush1.msra.mxu0 0.0
        %1106 = vmatprep.subr.mxu0 0.0
        %1107 = vmatpush1.msra.mxu0 0.0
        %1108 = vmatprep.subr.mxu0 0.0
        %1109 = vmatpush1.msra.mxu0 0.0
        %1110 = vmatprep.subr.mxu0 0.0
        %1111 = vmatpush1.msra.mxu0 0.0
        %1112 = vmatprep.subr.mxu0 0.0
        %1113 = vmatpush1.msra.mxu0 0.0
        %1114 = vmatprep.subr.mxu0 0.0
        %1115 = vmatpush1.msra.mxu0 0.0
        %1116 = vmatprep.subr.mxu0 0.0
        %1117 = vmatpush1.msra.mxu0 0.0
        %1118 = vmatprep.subr.mxu0 0.0
        %1119 = vmatpush1.msra.mxu0 0.0
        %1120 = vmatprep.subr.mxu0 0.0
        %1121 = vmatpush1.msra.mxu0 0.0
        %1122 = vmatprep.subr.mxu0 0.0
        %1123 = vmatpush1.msra.mxu0 0.0
        %1124 = vmatprep.subr.mxu0 0.0
        %1125 = vmatpush1.msra.mxu0 0.0
        %1126 = vmatprep.subr.mxu0 0.0
        %1127 = vmatpush1.msra.mxu0 0.0
        %1128 = vmatprep.subr.mxu0 0.0
        %1129 = vmatpush1.msra.mxu0 0.0
        %1130 = vmatprep.subr.mxu0 0.0
        %1131 = vmatpush1.msra.mxu0 0.0
        %1132 = vmatprep.subr.mxu0 0.0
        %1133 = vmatpush1.msra.mxu0 0.0
        %1134 = vmatprep.subr.mxu0 0.0
        %1135 = vmatpush1.msra.mxu0 0.0
        %1136 = vmatprep.subr.mxu0 0.0
        %1137 = vmatpush1.msra.mxu0 0.0
        %1138 = vmatprep.subr.mxu0 0.0
        %1139 = vmatpush1.msra.mxu0 0.0
        %1140 = vmatprep.subr.mxu0 0.0
        %1141 = vmatpush1.msra.mxu0 0.0
        %1142 = vmatprep.subr.mxu0 0.0
        %1143 = vmatpush1.msra.mxu0 0.0
        %1144 = vmatprep.subr.mxu0 0.0
        %1145 = vmatpush1.msra.mxu0 0.0
        %1146 = vmatprep.subr.mxu0 0.0
        %1147 = vmatpush1.msra.mxu0 0.0
        %1148 = vmatprep.subr.mxu0 0.0
        %1149 = vmatpush1.msra.mxu0 0.0
        %1150 = vmatprep.subr.mxu0 0.0
        %1151 = vmatpush1.msra.mxu0 0.0
        %1152 = vmatprep.subr.mxu0 0.0
        %1153 = vmatpush1.msra.mxu0 0.0
        %1154 = vmatprep.subr.mxu0 0.0
        %1155 = vmatpush1.msra.mxu0 0.0
        %1156 = vmatprep.mubr.f32.mxu0 0.0
        %1157 = vmatmul.mubr.f32.gmra.mrb[0].mxu0 %v1090
        %v1158 = vpop.f32.mrb[0].mxu0
        %v1159 = vadd.f32 0.0, %v1158
        %v1160 = vpop.f32.mrb[0].mxu0
        %1161 = vdwg.mxu0
        %v1162 = vld [vmem:[#allocation13] sm:$0xff]
        %1163 = vrot.lane.b32.xlu0 %v829, 120
        %v1164 = vpop.permute.xlu0 %1163
        %1165 = vrot.lane.b32.xlu0 %v913, 120
        %v1166 = vpop.permute.xlu0 %1165
        %v1167 = vsel %vm1000, %v1164, 0
        %v1169 = vsel %vm1000, %v1166, 0
        %1171 = vmatprep.subr.mxu0 0.0
        %1172 = vmatpush1.xpose.msra.mxu0 %v1169
        %1173 = vmatprep.subr.mxu0 0.0
        %1174 = vmatpush1.xpose.msra.mxu0 0.0
        %1175 = vmatprep.subr.mxu0 0.0
        %1176 = vmatpush1.xpose.msra.mxu0 0.0
        %1177 = vmatprep.subr.mxu0 0.0
        %1178 = vmatpush1.xpose.msra.mxu0 0.0
        %1179 = vmatprep.subr.mxu0 0.0
        %1180 = vmatpush1.xpose.msra.mxu0 0.0
        %1181 = vmatprep.subr.mxu0 0.0
        %1182 = vmatpush1.xpose.msra.mxu0 0.0
        %1183 = vmatprep.subr.mxu0 0.0
        %1184 = vmatpush1.xpose.msra.mxu0 0.0
        %1185 = vmatprep.subr.mxu0 0.0
        %1186 = vmatpush1.xpose.msra.mxu0 0.0
        %1187 = vmatprep.subr.mxu0 0.0
        %1188 = vmatpush1.xpose.msra.mxu0 0.0
        %1189 = vmatprep.subr.mxu0 0.0
        %1190 = vmatpush1.xpose.msra.mxu0 0.0
        %1191 = vmatprep.subr.mxu0 0.0
        %1192 = vmatpush1.xpose.msra.mxu0 0.0
        %1193 = vmatprep.subr.mxu0 0.0
        %1194 = vmatpush1.xpose.msra.mxu0 0.0
        %1195 = vmatprep.subr.mxu0 0.0
        %1196 = vmatpush1.xpose.msra.mxu0 0.0
        %1197 = vmatprep.subr.mxu0 0.0
        %1198 = vmatpush1.xpose.msra.mxu0 0.0
        %1199 = vmatprep.subr.mxu0 0.0
        %1200 = vmatpush1.xpose.msra.mxu0 0.0
        %1201 = vmatprep.subr.mxu0 0.0
        %1202 = vmatpush1.xpose.msra.mxu0 0.0
        %1203 = vmatprep.subr.mxu0 0.0
        %1204 = vmatpush1.xpose.msra.mxu0 0.0
        %1205 = vmatprep.subr.mxu0 0.0
        %1206 = vmatpush1.xpose.msra.mxu0 0.0
        %1207 = vmatprep.subr.mxu0 0.0
        %1208 = vmatpush1.xpose.msra.mxu0 0.0
        %1209 = vmatprep.subr.mxu0 0.0
        %1210 = vmatpush1.xpose.msra.mxu0 0.0
        %1211 = vmatprep.subr.mxu0 0.0
        %1212 = vmatpush1.xpose.msra.mxu0 0.0
        %1213 = vmatprep.subr.mxu0 0.0
        %1214 = vmatpush1.xpose.msra.mxu0 0.0
        %1215 = vmatprep.subr.mxu0 0.0
        %1216 = vmatpush1.xpose.msra.mxu0 0.0
        %1217 = vmatprep.subr.mxu0 0.0
        %1218 = vmatpush1.xpose.msra.mxu0 0.0
        %1219 = vmatprep.subr.mxu0 0.0
        %1220 = vmatpush1.xpose.msra.mxu0 0.0
        %1221 = vmatprep.subr.mxu0 0.0
        %1222 = vmatpush1.xpose.msra.mxu0 0.0
        %1223 = vmatprep.subr.mxu0 0.0
        %1224 = vmatpush1.xpose.msra.mxu0 0.0
        %1225 = vmatprep.subr.mxu0 0.0
        %1226 = vmatpush1.xpose.msra.mxu0 0.0
        %1227 = vmatprep.subr.mxu0 0.0
        %1228 = vmatpush1.xpose.msra.mxu0 0.0
        %1229 = vmatprep.subr.mxu0 0.0
        %1230 = vmatpush1.xpose.msra.mxu0 0.0
        %1231 = vmatprep.subr.mxu0 0.0
        %1232 = vmatpush1.xpose.msra.mxu0 0.0
        %1233 = vmatprep.subr.mxu0 0.0
        %1234 = vmatpush1.xpose.msra.mxu0 0.0
        %1235 = vmatprep.mubr.f32.mxu0 0.0
        %1236 = vmatmul.mubr.f32.gmra.mrb[0].mxu0 %v1167
        %v1237 = vpop.f32.mrb[0].mxu0
        %v1238 = vadd.f32 0.0, %v1237
        %v1239 = vpop.f32.mrb[0].mxu0
        %1240 = vdwg.mxu0
        %v1241 = vmul.f32 %v1238, 0.17677669
        %v1242 = vsel %vm1000, %v1241, -inf
        %1243 = vmax.xlane.f32.xlu0 %v1242
        %v1244 = vpop.xlane.xlu0 %1243
        %v1245 = vsub.f32 %v1241, %v1244
        %v1246 = vmul.f32 %v1245, 1.442695
        %v1247 = vpow.pop %v1246
        %v1248 = vsel %vm1000, %v1247, 0.0
        %1249 = vadd.xlane.f32.xlu0 %v1248
        %v1250 = vpop.xlane.xlu0 %1249
        %v1251 = vrcp.pop %v1250
        %v1252 = vmul.f32 %v1247, %v1251
        %1254 = vrot.lane.b32.xlu0 %v997, 120
        %v1255 = vpop.permute.xlu0 %1254
        %v1258 = vsel %vm1000, %v1252, 0
        %1260 = vmatprep.subr.mxu0 0.0
        %1261 = vmatpush1.msra.mxu0 %v1255
        %1262 = vmatprep.subr.mxu0 0.0
        %1263 = vmatpush1.msra.mxu0 0.0
        %1264 = vmatprep.subr.mxu0 0.0
        %1265 = vmatpush1.msra.mxu0 0.0
        %1266 = vmatprep.subr.mxu0 0.0
        %1267 = vmatpush1.msra.mxu0 0.0
        %1268 = vmatprep.subr.mxu0 0.0
        %1269 = vmatpush1.msra.mxu0 0.0
        %1270 = vmatprep.subr.mxu0 0.0
        %1271 = vmatpush1.msra.mxu0 0.0
        %1272 = vmatprep.subr.mxu0 0.0
        %1273 = vmatpush1.msra.mxu0 0.0
        %1274 = vmatprep.subr.mxu0 0.0
        %1275 = vmatpush1.msra.mxu0 0.0
        %1276 = vmatprep.subr.mxu0 0.0
        %1277 = vmatpush1.msra.mxu0 0.0
        %1278 = vmatprep.subr.mxu0 0.0
        %1279 = vmatpush1.msra.mxu0 0.0
        %1280 = vmatprep.subr.mxu0 0.0
        %1281 = vmatpush1.msra.mxu0 0.0
        %1282 = vmatprep.subr.mxu0 0.0
        %1283 = vmatpush1.msra.mxu0 0.0
        %1284 = vmatprep.subr.mxu0 0.0
        %1285 = vmatpush1.msra.mxu0 0.0
        %1286 = vmatprep.subr.mxu0 0.0
        %1287 = vmatpush1.msra.mxu0 0.0
        %1288 = vmatprep.subr.mxu0 0.0
        %1289 = vmatpush1.msra.mxu0 0.0
        %1290 = vmatprep.subr.mxu0 0.0
        %1291 = vmatpush1.msra.mxu0 0.0
        %1292 = vmatprep.subr.mxu0 0.0
        %1293 = vmatpush1.msra.mxu0 0.0
        %1294 = vmatprep.subr.mxu0 0.0
        %1295 = vmatpush1.msra.mxu0 0.0
        %1296 = vmatprep.subr.mxu0 0.0
        %1297 = vmatpush1.msra.mxu0 0.0
        %1298 = vmatprep.subr.mxu0 0.0
        %1299 = vmatpush1.msra.mxu0 0.0
        %1300 = vmatprep.subr.mxu0 0.0
        %1301 = vmatpush1.msra.mxu0 0.0
        %1302 = vmatprep.subr.mxu0 0.0
        %1303 = vmatpush1.msra.mxu0 0.0
        %1304 = vmatprep.subr.mxu0 0.0
        %1305 = vmatpush1.msra.mxu0 0.0
        %1306 = vmatprep.subr.mxu0 0.0
        %1307 = vmatpush1.msra.mxu0 0.0
        %1308 = vmatprep.subr.mxu0 0.0
        %1309 = vmatpush1.msra.mxu0 0.0
        %1310 = vmatprep.subr.mxu0 0.0
        %1311 = vmatpush1.msra.mxu0 0.0
        %1312 = vmatprep.subr.mxu0 0.0
        %1313 = vmatpush1.msra.mxu0 0.0
        %1314 = vmatprep.subr.mxu0 0.0
        %1315 = vmatpush1.msra.mxu0 0.0
        %1316 = vmatprep.subr.mxu0 0.0
        %1317 = vmatpush1.msra.mxu0 0.0
        %1318 = vmatprep.subr.mxu0 0.0
        %1319 = vmatpush1.msra.mxu0 0.0
        %1320 = vmatprep.subr.mxu0 0.0
        %1321 = vmatpush1.msra.mxu0 0.0
        %1322 = vmatprep.subr.mxu0 0.0
        %1323 = vmatpush1.msra.mxu0 0.0
        %1324 = vmatprep.mubr.f32.mxu0 0.0
        %1325 = vmatmul.mubr.f32.gmra.mrb[0].mxu0 %v1258
        %v1326 = vpop.f32.mrb[0].mxu0
        %v1327 = vadd.f32 0.0, %v1326
        %v1328 = vpop.f32.mrb[0].mxu0
        %1329 = vdwg.mxu0
        %v1330 = vld [vmem:[#allocation13 + $0x8] sm:$0xff]
        %v1332 = vsel %vm1000, %v1327, 0
        %1334 = vmatprep.subr.mxu0 0.0
        %1335 = vmatpush1.msra.mxu0 %v1330
        %1336 = vmatprep.subr.mxu0 0.0
        %1337 = vmatpush1.msra.mxu0 0.0
        %1338 = vmatprep.subr.mxu0 0.0
        %1339 = vmatpush1.msra.mxu0 0.0
        %1340 = vmatprep.subr.mxu0 0.0
        %1341 = vmatpush1.msra.mxu0 0.0
        %1342 = vmatprep.subr.mxu0 0.0
        %1343 = vmatpush1.msra.mxu0 0.0
        %1344 = vmatprep.subr.mxu0 0.0
        %1345 = vmatpush1.msra.mxu0 0.0
        %1346 = vmatprep.subr.mxu0 0.0
        %1347 = vmatpush1.msra.mxu0 0.0
        %1348 = vmatprep.subr.mxu0 0.0
        %1349 = vmatpush1.msra.mxu0 0.0
        %1350 = vmatprep.subr.mxu0 0.0
        %1351 = vmatpush1.msra.mxu0 0.0
        %1352 = vmatprep.subr.mxu0 0.0
        %1353 = vmatpush1.msra.mxu0 0.0
        %1354 = vmatprep.subr.mxu0 0.0
        %1355 = vmatpush1.msra.mxu0 0.0
        %1356 = vmatprep.subr.mxu0 0.0
        %1357 = vmatpush1.msra.mxu0 0.0
        %1358 = vmatprep.subr.mxu0 0.0
        %1359 = vmatpush1.msra.mxu0 0.0
        %1360 = vmatprep.subr.mxu0 0.0
        %1361 = vmatpush1.msra.mxu0 0.0
        %1362 = vmatprep.subr.mxu0 0.0
        %1363 = vmatpush1.msra.mxu0 0.0
        %1364 = vmatprep.subr.mxu0 0.0
        %1365 = vmatpush1.msra.mxu0 0.0
        %1366 = vmatprep.subr.mxu0 0.0
        %1367 = vmatpush1.msra.mxu0 0.0
        %1368 = vmatprep.subr.mxu0 0.0
        %1369 = vmatpush1.msra.mxu0 0.0
        %1370 = vmatprep.subr.mxu0 0.0
        %1371 = vmatpush1.msra.mxu0 0.0
        %1372 = vmatprep.subr.mxu0 0.0
        %1373 = vmatpush1.msra.mxu0 0.0
        %1374 = vmatprep.subr.mxu0 0.0
        %1375 = vmatpush1.msra.mxu0 0.0
        %1376 = vmatprep.subr.mxu0 0.0
        %1377 = vmatpush1.msra.mxu0 0.0
        %1378 = vmatprep.subr.mxu0 0.0
        %1379 = vmatpush1.msra.mxu0 0.0
        %1380 = vmatprep.subr.mxu0 0.0
        %1381 = vmatpush1.msra.mxu0 0.0
        %1382 = vmatprep.subr.mxu0 0.0
        %1383 = vmatpush1.msra.mxu0 0.0
        %1384 = vmatprep.subr.mxu0 0.0
        %1385 = vmatpush1.msra.mxu0 0.0
        %1386 = vmatprep.subr.mxu0 0.0
        %1387 = vmatpush1.msra.mxu0 0.0
        %1388 = vmatprep.subr.mxu0 0.0
        %1389 = vmatpush1.msra.mxu0 0.0
        %1390 = vmatprep.subr.mxu0 0.0
        %1391 = vmatpush1.msra.mxu0 0.0
        %1392 = vmatprep.subr.mxu0 0.0
        %1393 = vmatpush1.msra.mxu0 0.0
        %1394 = vmatprep.subr.mxu0 0.0
        %1395 = vmatpush1.msra.mxu0 0.0
        %1396 = vmatprep.subr.mxu0 0.0
        %1397 = vmatpush1.msra.mxu0 0.0
        %1398 = vmatprep.mubr.f32.mxu0 0.0
        %1399 = vmatmul.mubr.f32.gmra.mrb[0].mxu0 %v1332
        %v1400 = vpop.f32.mrb[0].mxu0
        %v1401 = vadd.f32 0.0, %v1400
        %v1402 = vpop.f32.mrb[0].mxu0
        %1403 = vdwg.mxu0
        %v1405 = vsel %vm1000, %v1159, 0
        %1407 = vmatprep.subr.mxu0 0.0
        %1408 = vmatpush1.msra.mxu0 %v1162
        %1409 = vmatprep.subr.mxu0 0.0
        %1410 = vmatpush1.msra.mxu0 0.0
        %1411 = vmatprep.subr.mxu0 0.0
        %1412 = vmatpush1.msra.mxu0 0.0
        %1413 = vmatprep.subr.mxu0 0.0
        %1414 = vmatpush1.msra.mxu0 0.0
        %1415 = vmatprep.subr.mxu0 0.0
        %1416 = vmatpush1.msra.mxu0 0.0
        %1417 = vmatprep.subr.mxu0 0.0
        %1418 = vmatpush1.msra.mxu0 0.0
        %1419 = vmatprep.subr.mxu0 0.0
        %1420 = vmatpush1.msra.mxu0 0.0
        %1421 = vmatprep.subr.mxu0 0.0
        %1422 = vmatpush1.msra.mxu0 0.0
        %1423 = vmatprep.subr.mxu0 0.0
        %1424 = vmatpush1.msra.mxu0 0.0
        %1425 = vmatprep.subr.mxu0 0.0
        %1426 = vmatpush1.msra.mxu0 0.0
        %1427 = vmatprep.subr.mxu0 0.0
        %1428 = vmatpush1.msra.mxu0 0.0
        %1429 = vmatprep.subr.mxu0 0.0
        %1430 = vmatpush1.msra.mxu0 0.0
        %1431 = vmatprep.subr.mxu0 0.0
        %1432 = vmatpush1.msra.mxu0 0.0
        %1433 = vmatprep.subr.mxu0 0.0
        %1434 = vmatpush1.msra.mxu0 0.0
        %1435 = vmatprep.subr.mxu0 0.0
        %1436 = vmatpush1.msra.mxu0 0.0
        %1437 = vmatprep.subr.mxu0 0.0
        %1438 = vmatpush1.msra.mxu0 0.0
        %1439 = vmatprep.subr.mxu0 0.0
        %1440 = vmatpush1.msra.mxu0 0.0
        %1441 = vmatprep.subr.mxu0 0.0
        %1442 = vmatpush1.msra.mxu0 0.0
        %1443 = vmatprep.subr.mxu0 0.0
        %1444 = vmatpush1.msra.mxu0 0.0
        %1445 = vmatprep.subr.mxu0 0.0
        %1446 = vmatpush1.msra.mxu0 0.0
        %1447 = vmatprep.subr.mxu0 0.0
        %1448 = vmatpush1.msra.mxu0 0.0
        %1449 = vmatprep.subr.mxu0 0.0
        %1450 = vmatpush1.msra.mxu0 0.0
        %1451 = vmatprep.subr.mxu0 0.0
        %1452 = vmatpush1.msra.mxu0 0.0
        %1453 = vmatprep.subr.mxu0 0.0
        %1454 = vmatpush1.msra.mxu0 0.0
        %1455 = vmatprep.subr.mxu0 0.0
        %1456 = vmatpush1.msra.mxu0 0.0
        %1457 = vmatprep.subr.mxu0 0.0
        %1458 = vmatpush1.msra.mxu0 0.0
        %1459 = vmatprep.subr.mxu0 0.0
        %1460 = vmatpush1.msra.mxu0 0.0
        %1461 = vmatprep.subr.mxu0 0.0
        %1462 = vmatpush1.msra.mxu0 0.0
        %1463 = vmatprep.subr.mxu0 0.0
        %1464 = vmatpush1.msra.mxu0 0.0
        %1465 = vmatprep.subr.mxu0 0.0
        %1466 = vmatpush1.msra.mxu0 0.0
        %1467 = vmatprep.subr.mxu0 0.0
        %1468 = vmatpush1.msra.mxu0 0.0
        %1469 = vmatprep.subr.mxu0 0.0
        %1470 = vmatpush1.msra.mxu0 0.0
        %1471 = vmatprep.mubr.f32.mxu0 0.0
        %1472 = vmatmul.mubr.f32.gmra.mrb[0].mxu0 %v1405
        %v1473 = vpop.f32.mrb[0].mxu0
        %v1474 = vadd.f32 %v1401, %v1473
        %v1475 = vpop.f32.mrb[0].mxu0
        %1476 = vdwg.mxu0
        %1477 = vrot.lane.b32.xlu0 %v829, 112
        %v1478 = vpop.permute.xlu0 %1477
        %1479 = vrot.lane.b32.xlu0 %v913, 112
        %v1480 = vpop.permute.xlu0 %1479
        %v1481 = vsel %vm1000, %v1478, 0
        %v1483 = vsel %vm1000, %v1480, 0
        %1485 = vmatprep.subr.mxu0 0.0
        %1486 = vmatpush1.xpose.msra.mxu0 %v1483
        %1487 = vmatprep.subr.mxu0 0.0
        %1488 = vmatpush1.xpose.msra.mxu0 0.0
        %1489 = vmatprep.subr.mxu0 0.0
        %1490 = vmatpush1.xpose.msra.mxu0 0.0
        %1491 = vmatprep.subr.mxu0 0.0
        %1492 = vmatpush1.xpose.msra.mxu0 0.0
        %1493 = vmatprep.subr.mxu0 0.0
        %1494 = vmatpush1.xpose.msra.mxu0 0.0
        %1495 = vmatprep.subr.mxu0 0.0
        %1496 = vmatpush1.xpose.msra.mxu0 0.0
        %1497 = vmatprep.subr.mxu0 0.0
        %1498 = vmatpush1.xpose.msra.mxu0 0.0
        %1499 = vmatprep.subr.mxu0 0.0
        %1500 = vmatpush1.xpose.msra.mxu0 0.0
        %1501 = vmatprep.subr.mxu0 0.0
        %1502 = vmatpush1.xpose.msra.mxu0 0.0
        %1503 = vmatprep.subr.mxu0 0.0
        %1504 = vmatpush1.xpose.msra.mxu0 0.0
        %1505 = vmatprep.subr.mxu0 0.0
        %1506 = vmatpush1.xpose.msra.mxu0 0.0
        %1507 = vmatprep.subr.mxu0 0.0
        %1508 = vmatpush1.xpose.msra.mxu0 0.0
        %1509 = vmatprep.subr.mxu0 0.0
        %1510 = vmatpush1.xpose.msra.mxu0 0.0
        %1511 = vmatprep.subr.mxu0 0.0
        %1512 = vmatpush1.xpose.msra.mxu0 0.0
        %1513 = vmatprep.subr.mxu0 0.0
        %1514 = vmatpush1.xpose.msra.mxu0 0.0
        %1515 = vmatprep.subr.mxu0 0.0
        %1516 = vmatpush1.xpose.msra.mxu0 0.0
        %1517 = vmatprep.subr.mxu0 0.0
        %1518 = vmatpush1.xpose.msra.mxu0 0.0
        %1519 = vmatprep.subr.mxu0 0.0
        %1520 = vmatpush1.xpose.msra.mxu0 0.0
        %1521 = vmatprep.subr.mxu0 0.0
        %1522 = vmatpush1.xpose.msra.mxu0 0.0
        %1523 = vmatprep.subr.mxu0 0.0
        %1524 = vmatpush1.xpose.msra.mxu0 0.0
        %1525 = vmatprep.subr.mxu0 0.0
        %1526 = vmatpush1.xpose.msra.mxu0 0.0
        %1527 = vmatprep.subr.mxu0 0.0
        %1528 = vmatpush1.xpose.msra.mxu0 0.0
        %1529 = vmatprep.subr.mxu0 0.0
        %1530 = vmatpush1.xpose.msra.mxu0 0.0
        %1531 = vmatprep.subr.mxu0 0.0
        %1532 = vmatpush1.xpose.msra.mxu0 0.0
        %1533 = vmatprep.subr.mxu0 0.0
        %1534 = vmatpush1.xpose.msra.mxu0 0.0
        %1535 = vmatprep.subr.mxu0 0.0
        %1536 = vmatpush1.xpose.msra.mxu0 0.0
        %1537 = vmatprep.subr.mxu0 0.0
        %1538 = vmatpush1.xpose.msra.mxu0 0.0
        %1539 = vmatprep.subr.mxu0 0.0
        %1540 = vmatpush1.xpose.msra.mxu0 0.0
        %1541 = vmatprep.subr.mxu0 0.0
        %1542 = vmatpush1.xpose.msra.mxu0 0.0
        %1543 = vmatprep.subr.mxu0 0.0
        %1544 = vmatpush1.xpose.msra.mxu0 0.0
        %1545 = vmatprep.subr.mxu0 0.0
        %1546 = vmatpush1.xpose.msra.mxu0 0.0
        %1547 = vmatprep.subr.mxu0 0.0
        %1548 = vmatpush1.xpose.msra.mxu0 0.0
        %1549 = vmatprep.mubr.f32.mxu0 0.0
        %1550 = vmatmul.mubr.f32.gmra.mrb[0].mxu0 %v1481
        %v1551 = vpop.f32.mrb[0].mxu0
        %v1552 = vadd.f32 0.0, %v1551
        %v1553 = vpop.f32.mrb[0].mxu0
        %1554 = vdwg.mxu0
        %v1555 = vmul.f32 %v1552, 0.17677669
        %v1556 = vsel %vm1000, %v1555, -inf
        %1557 = vmax.xlane.f32.xlu0 %v1556
        %v1558 = vpop.xlane.xlu0 %1557
        %v1559 = vsub.f32 %v1555, %v1558
        %v1560 = vmul.f32 %v1559, 1.442695
        %v1561 = vpow.pop %v1560
        %v1562 = vsel %vm1000, %v1561, 0.0
        %1563 = vadd.xlane.f32.xlu0 %v1562
        %v1564 = vpop.xlane.xlu0 %1563
        %v1565 = vrcp.pop %v1564
        %v1566 = vmul.f32 %v1561, %v1565
        %1567 = vrot.lane.b32.xlu0 %v997, 112
        %v1568 = vpop.permute.xlu0 %1567
        %v1571 = vsel %vm1000, %v1566, 0
        %1573 = vmatprep.subr.mxu0 0.0
        %1574 = vmatpush1.msra.mxu0 %v1568
        %1575 = vmatprep.subr.mxu0 0.0
        %1576 = vmatpush1.msra.mxu0 0.0
        %1577 = vmatprep.subr.mxu0 0.0
        %1578 = vmatpush1.msra.mxu0 0.0
        %1579 = vmatprep.subr.mxu0 0.0
        %1580 = vmatpush1.msra.mxu0 0.0
        %1581 = vmatprep.subr.mxu0 0.0
        %1582 = vmatpush1.msra.mxu0 0.0
        %1583 = vmatprep.subr.mxu0 0.0
        %1584 = vmatpush1.msra.mxu0 0.0
        %1585 = vmatprep.subr.mxu0 0.0
        %1586 = vmatpush1.msra.mxu0 0.0
        %1587 = vmatprep.subr.mxu0 0.0
        %1588 = vmatpush1.msra.mxu0 0.0
        %1589 = vmatprep.subr.mxu0 0.0
        %1590 = vmatpush1.msra.mxu0 0.0
        %1591 = vmatprep.subr.mxu0 0.0
        %1592 = vmatpush1.msra.mxu0 0.0
        %1593 = vmatprep.subr.mxu0 0.0
        %1594 = vmatpush1.msra.mxu0 0.0
        %1595 = vmatprep.subr.mxu0 0.0
        %1596 = vmatpush1.msra.mxu0 0.0
        %1597 = vmatprep.subr.mxu0 0.0
        %1598 = vmatpush1.msra.mxu0 0.0
        %1599 = vmatprep.subr.mxu0 0.0
        %1600 = vmatpush1.msra.mxu0 0.0
        %1601 = vmatprep.subr.mxu0 0.0
        %1602 = vmatpush1.msra.mxu0 0.0
        %1603 = vmatprep.subr.mxu0 0.0
        %1604 = vmatpush1.msra.mxu0 0.0
        %1605 = vmatprep.subr.mxu0 0.0
        %1606 = vmatpush1.msra.mxu0 0.0
        %1607 = vmatprep.subr.mxu0 0.0
        %1608 = vmatpush1.msra.mxu0 0.0
        %1609 = vmatprep.subr.mxu0 0.0
        %1610 = vmatpush1.msra.mxu0 0.0
        %1611 = vmatprep.subr.mxu0 0.0
        %1612 = vmatpush1.msra.mxu0 0.0
        %1613 = vmatprep.subr.mxu0 0.0
        %1614 = vmatpush1.msra.mxu0 0.0
        %1615 = vmatprep.subr.mxu0 0.0
        %1616 = vmatpush1.msra.mxu0 0.0
        %1617 = vmatprep.subr.mxu0 0.0
        %1618 = vmatpush1.msra.mxu0 0.0
        %1619 = vmatprep.subr.mxu0 0.0
        %1620 = vmatpush1.msra.mxu0 0.0
        %1621 = vmatprep.subr.mxu0 0.0
        %1622 = vmatpush1.msra.mxu0 0.0
        %1623 = vmatprep.subr.mxu0 0.0
        %1624 = vmatpush1.msra.mxu0 0.0
        %1625 = vmatprep.subr.mxu0 0.0
        %1626 = vmatpush1.msra.mxu0 0.0
        %1627 = vmatprep.subr.mxu0 0.0
        %1628 = vmatpush1.msra.mxu0 0.0
        %1629 = vmatprep.subr.mxu0 0.0
        %1630 = vmatpush1.msra.mxu0 0.0
        %1631 = vmatprep.subr.mxu0 0.0
        %1632 = vmatpush1.msra.mxu0 0.0
        %1633 = vmatprep.subr.mxu0 0.0
        %1634 = vmatpush1.msra.mxu0 0.0
        %1635 = vmatprep.subr.mxu0 0.0
        %1636 = vmatpush1.msra.mxu0 0.0
        %1637 = vmatprep.mubr.f32.mxu0 0.0
        %1638 = vmatmul.mubr.f32.gmra.mrb[0].mxu0 %v1571
        %v1639 = vpop.f32.mrb[0].mxu0
        %v1640 = vadd.f32 0.0, %v1639
        %v1641 = vpop.f32.mrb[0].mxu0
        %1642 = vdwg.mxu0
        %v1643 = vld [vmem:[#allocation13 + $0x10] sm:$0xff]
        %v1645 = vsel %vm1000, %v1640, 0
        %1647 = vmatprep.subr.mxu0 0.0
        %1648 = vmatpush1.msra.mxu0 %v1643
        %1649 = vmatprep.subr.mxu0 0.0
        %1650 = vmatpush1.msra.mxu0 0.0
        %1651 = vmatprep.subr.mxu0 0.0
        %1652 = vmatpush1.msra.mxu0 0.0
        %1653 = vmatprep.subr.mxu0 0.0
        %1654 = vmatpush1.msra.mxu0 0.0
        %1655 = vmatprep.subr.mxu0 0.0
        %1656 = vmatpush1.msra.mxu0 0.0
        %1657 = vmatprep.subr.mxu0 0.0
        %1658 = vmatpush1.msra.mxu0 0.0
        %1659 = vmatprep.subr.mxu0 0.0
        %1660 = vmatpush1.msra.mxu0 0.0
        %1661 = vmatprep.subr.mxu0 0.0
        %1662 = vmatpush1.msra.mxu0 0.0
        %1663 = vmatprep.subr.mxu0 0.0
        %1664 = vmatpush1.msra.mxu0 0.0
        %1665 = vmatprep.subr.mxu0 0.0
        %1666 = vmatpush1.msra.mxu0 0.0
        %1667 = vmatprep.subr.mxu0 0.0
        %1668 = vmatpush1.msra.mxu0 0.0
        %1669 = vmatprep.subr.mxu0 0.0
        %1670 = vmatpush1.msra.mxu0 0.0
        %1671 = vmatprep.subr.mxu0 0.0
        %1672 = vmatpush1.msra.mxu0 0.0
        %1673 = vmatprep.subr.mxu0 0.0
        %1674 = vmatpush1.msra.mxu0 0.0
        %1675 = vmatprep.subr.mxu0 0.0
        %1676 = vmatpush1.msra.mxu0 0.0
        %1677 = vmatprep.subr.mxu0 0.0
        %1678 = vmatpush1.msra.mxu0 0.0
        %1679 = vmatprep.subr.mxu0 0.0
        %1680 = vmatpush1.msra.mxu0 0.0
        %1681 = vmatprep.subr.mxu0 0.0
        %1682 = vmatpush1.msra.mxu0 0.0
        %1683 = vmatprep.subr.mxu0 0.0
        %1684 = vmatpush1.msra.mxu0 0.0
        %1685 = vmatprep.subr.mxu0 0.0
        %1686 = vmatpush1.msra.mxu0 0.0
        %1687 = vmatprep.subr.mxu0 0.0
        %1688 = vmatpush1.msra.mxu0 0.0
        %1689 = vmatprep.subr.mxu0 0.0
        %1690 = vmatpush1.msra.mxu0 0.0
        %1691 = vmatprep.subr.mxu0 0.0
        %1692 = vmatpush1.msra.mxu0 0.0
        %1693 = vmatprep.subr.mxu0 0.0
        %1694 = vmatpush1.msra.mxu0 0.0
        %1695 = vmatprep.subr.mxu0 0.0
        %1696 = vmatpush1.msra.mxu0 0.0
        %1697 = vmatprep.subr.mxu0 0.0
        %1698 = vmatpush1.msra.mxu0 0.0
        %1699 = vmatprep.subr.mxu0 0.0
        %1700 = vmatpush1.msra.mxu0 0.0
        %1701 = vmatprep.subr.mxu0 0.0
        %1702 = vmatpush1.msra.mxu0 0.0
        %1703 = vmatprep.subr.mxu0 0.0
        %1704 = vmatpush1.msra.mxu0 0.0
        %1705 = vmatprep.subr.mxu0 0.0
        %1706 = vmatpush1.msra.mxu0 0.0
        %1707 = vmatprep.subr.mxu0 0.0
        %1708 = vmatpush1.msra.mxu0 0.0
        %1709 = vmatprep.subr.mxu0 0.0
        %1710 = vmatpush1.msra.mxu0 0.0
        %1711 = vmatprep.mubr.f32.mxu0 0.0
        %1712 = vmatmul.mubr.f32.gmra.mrb[0].mxu0 %v1645
        %v1713 = vpop.f32.mrb[0].mxu0
        %v1714 = vadd.f32 0.0, %v1713
        %v1715 = vpop.f32.mrb[0].mxu0
        %1716 = vdwg.mxu0
        %v1717 = vadd.f32 %v1474, %v1714
        %1718 = vrot.lane.b32.xlu0 %v829, 104
        %v1719 = vpop.permute.xlu0 %1718
        %1720 = vrot.lane.b32.xlu0 %v913, 104
        %v1721 = vpop.permute.xlu0 %1720
        %v1722 = vsel %vm1000, %v1719, 0
        %v1724 = vsel %vm1000, %v1721, 0
        %1726 = vmatprep.subr.mxu0 0.0
        %1727 = vmatpush1.xpose.msra.mxu0 %v1724
        %1728 = vmatprep.subr.mxu0 0.0
        %1729 = vmatpush1.xpose.msra.mxu0 0.0
        %1730 = vmatprep.subr.mxu0 0.0
        %1731 = vmatpush1.xpose.msra.mxu0 0.0
        %1732 = vmatprep.subr.mxu0 0.0
        %1733 = vmatpush1.xpose.msra.mxu0 0.0
        %1734 = vmatprep.subr.mxu0 0.0
        %1735 = vmatpush1.xpose.msra.mxu0 0.0
        %1736 = vmatprep.subr.mxu0 0.0
        %1737 = vmatpush1.xpose.msra.mxu0 0.0
        %1738 = vmatprep.subr.mxu0 0.0
        %1739 = vmatpush1.xpose.msra.mxu0 0.0
        %1740 = vmatprep.subr.mxu0 0.0
        %1741 = vmatpush1.xpose.msra.mxu0 0.0
        %1742 = vmatprep.subr.mxu0 0.0
        %1743 = vmatpush1.xpose.msra.mxu0 0.0
        %1744 = vmatprep.subr.mxu0 0.0
        %1745 = vmatpush1.xpose.msra.mxu0 0.0
        %1746 = vmatprep.subr.mxu0 0.0
        %1747 = vmatpush1.xpose.msra.mxu0 0.0
        %1748 = vmatprep.subr.mxu0 0.0
        %1749 = vmatpush1.xpose.msra.mxu0 0.0
        %1750 = vmatprep.subr.mxu0 0.0
        %1751 = vmatpush1.xpose.msra.mxu0 0.0
        %1752 = vmatprep.subr.mxu0 0.0
        %1753 = vmatpush1.xpose.msra.mxu0 0.0
        %1754 = vmatprep.subr.mxu0 0.0
        %1755 = vmatpush1.xpose.msra.mxu0 0.0
        %1756 = vmatprep.subr.mxu0 0.0
        %1757 = vmatpush1.xpose.msra.mxu0 0.0
        %1758 = vmatprep.subr.mxu0 0.0
        %1759 = vmatpush1.xpose.msra.mxu0 0.0
        %1760 = vmatprep.subr.mxu0 0.0
        %1761 = vmatpush1.xpose.msra.mxu0 0.0
        %1762 = vmatprep.subr.mxu0 0.0
        %1763 = vmatpush1.xpose.msra.mxu0 0.0
        %1764 = vmatprep.subr.mxu0 0.0
        %1765 = vmatpush1.xpose.msra.mxu0 0.0
        %1766 = vmatprep.subr.mxu0 0.0
        %1767 = vmatpush1.xpose.msra.mxu0 0.0
        %1768 = vmatprep.subr.mxu0 0.0
        %1769 = vmatpush1.xpose.msra.mxu0 0.0
        %1770 = vmatprep.subr.mxu0 0.0
        %1771 = vmatpush1.xpose.msra.mxu0 0.0
        %1772 = vmatprep.subr.mxu0 0.0
        %1773 = vmatpush1.xpose.msra.mxu0 0.0
        %1774 = vmatprep.subr.mxu0 0.0
        %1775 = vmatpush1.xpose.msra.mxu0 0.0
        %1776 = vmatprep.subr.mxu0 0.0
        %1777 = vmatpush1.xpose.msra.mxu0 0.0
        %1778 = vmatprep.subr.mxu0 0.0
        %1779 = vmatpush1.xpose.msra.mxu0 0.0
        %1780 = vmatprep.subr.mxu0 0.0
        %1781 = vmatpush1.xpose.msra.mxu0 0.0
        %1782 = vmatprep.subr.mxu0 0.0
        %1783 = vmatpush1.xpose.msra.mxu0 0.0
        %1784 = vmatprep.subr.mxu0 0.0
        %1785 = vmatpush1.xpose.msra.mxu0 0.0
        %1786 = vmatprep.subr.mxu0 0.0
        %1787 = vmatpush1.xpose.msra.mxu0 0.0
        %1788 = vmatprep.subr.mxu0 0.0
        %1789 = vmatpush1.xpose.msra.mxu0 0.0
        %1790 = vmatprep.mubr.f32.mxu0 0.0
        %1791 = vmatmul.mubr.f32.gmra.mrb[0].mxu0 %v1722
        %v1792 = vpop.f32.mrb[0].mxu0
        %v1793 = vadd.f32 0.0, %v1792
        %v1794 = vpop.f32.mrb[0].mxu0
        %1795 = vdwg.mxu0
        %v1796 = vmul.f32 %v1793, 0.17677669
        %v1797 = vsel %vm1000, %v1796, -inf
        %1798 = vmax.xlane.f32.xlu0 %v1797
        %v1799 = vpop.xlane.xlu0 %1798
        %v1800 = vsub.f32 %v1796, %v1799
        %v1801 = vmul.f32 %v1800, 1.442695
        %v1802 = vpow.pop %v1801
        %v1803 = vsel %vm1000, %v1802, 0.0
        %1804 = vadd.xlane.f32.xlu0 %v1803
        %v1805 = vpop.xlane.xlu0 %1804
        %v1806 = vrcp.pop %v1805
        %v1807 = vmul.f32 %v1802, %v1806
        %1808 = vrot.lane.b32.xlu0 %v997, 104
        %v1809 = vpop.permute.xlu0 %1808
        %v1812 = vsel %vm1000, %v1807, 0
        %1814 = vmatprep.subr.mxu0 0.0
        %1815 = vmatpush1.msra.mxu0 %v1809
        %1816 = vmatprep.subr.mxu0 0.0
        %1817 = vmatpush1.msra.mxu0 0.0
        %1818 = vmatprep.subr.mxu0 0.0
        %1819 = vmatpush1.msra.mxu0 0.0
        %1820 = vmatprep.subr.mxu0 0.0
        %1821 = vmatpush1.msra.mxu0 0.0
        %1822 = vmatprep.subr.mxu0 0.0
        %1823 = vmatpush1.msra.mxu0 0.0
        %1824 = vmatprep.subr.mxu0 0.0
        %1825 = vmatpush1.msra.mxu0 0.0
        %1826 = vmatprep.subr.mxu0 0.0
        %1827 = vmatpush1.msra.mxu0 0.0
        %1828 = vmatprep.subr.mxu0 0.0
        %1829 = vmatpush1.msra.mxu0 0.0
        %1830 = vmatprep.subr.mxu0 0.0
        %1831 = vmatpush1.msra.mxu0 0.0
        %1832 = vmatprep.subr.mxu0 0.0
        %1833 = vmatpush1.msra.mxu0 0.0
        %1834 = vmatprep.subr.mxu0 0.0
        %1835 = vmatpush1.msra.mxu0 0.0
        %1836 = vmatprep.subr.mxu0 0.0
        %1837 = vmatpush1.msra.mxu0 0.0
        %1838 = vmatprep.subr.mxu0 0.0
        %1839 = vmatpush1.msra.mxu0 0.0
        %1840 = vmatprep.subr.mxu0 0.0
        %1841 = vmatpush1.msra.mxu0 0.0
        %1842 = vmatprep.subr.mxu0 0.0
        %1843 = vmatpush1.msra.mxu0 0.0
        %1844 = vmatprep.subr.mxu0 0.0
        %1845 = vmatpush1.msra.mxu0 0.0
        %1846 = vmatprep.subr.mxu0 0.0
        %1847 = vmatpush1.msra.mxu0 0.0
        %1848 = vmatprep.subr.mxu0 0.0
        %1849 = vmatpush1.msra.mxu0 0.0
        %1850 = vmatprep.subr.mxu0 0.0
        %1851 = vmatpush1.msra.mxu0 0.0
        %1852 = vmatprep.subr.mxu0 0.0
        %1853 = vmatpush1.msra.mxu0 0.0
        %1854 = vmatprep.subr.mxu0 0.0
        %1855 = vmatpush1.msra.mxu0 0.0
        %1856 = vmatprep.subr.mxu0 0.0
        %1857 = vmatpush1.msra.mxu0 0.0
        %1858 = vmatprep.subr.mxu0 0.0
        %1859 = vmatpush1.msra.mxu0 0.0
        %1860 = vmatprep.subr.mxu0 0.0
        %1861 = vmatpush1.msra.mxu0 0.0
        %1862 = vmatprep.subr.mxu0 0.0
        %1863 = vmatpush1.msra.mxu0 0.0
        %1864 = vmatprep.subr.mxu0 0.0
        %1865 = vmatpush1.msra.mxu0 0.0
        %1866 = vmatprep.subr.mxu0 0.0
        %1867 = vmatpush1.msra.mxu0 0.0
        %1868 = vmatprep.subr.mxu0 0.0
        %1869 = vmatpush1.msra.mxu0 0.0
        %1870 = vmatprep.subr.mxu0 0.0
        %1871 = vmatpush1.msra.mxu0 0.0
        %1872 = vmatprep.subr.mxu0 0.0
        %1873 = vmatpush1.msra.mxu0 0.0
        %1874 = vmatprep.subr.mxu0 0.0
        %1875 = vmatpush1.msra.mxu0 0.0
        %1876 = vmatprep.subr.mxu0 0.0
        %1877 = vmatpush1.msra.mxu0 0.0
        %1878 = vmatprep.mubr.f32.mxu0 0.0
        %1879 = vmatmul.mubr.f32.gmra.mrb[0].mxu0 %v1812
        %v1880 = vpop.f32.mrb[0].mxu0
        %v1881 = vadd.f32 0.0, %v1880
        %v1882 = vpop.f32.mrb[0].mxu0
        %1883 = vdwg.mxu0
        %v1884 = vld [vmem:[#allocation13 + $0x18] sm:$0xff]
        %v1886 = vsel %vm1000, %v1881, 0
        %1888 = vmatprep.subr.mxu0 0.0
        %1889 = vmatpush1.msra.mxu0 %v1884
        %1890 = vmatprep.subr.mxu0 0.0
        %1891 = vmatpush1.msra.mxu0 0.0
        %1892 = vmatprep.subr.mxu0 0.0
        %1893 = vmatpush1.msra.mxu0 0.0
        %1894 = vmatprep.subr.mxu0 0.0
        %1895 = vmatpush1.msra.mxu0 0.0
        %1896 = vmatprep.subr.mxu0 0.0
        %1897 = vmatpush1.msra.mxu0 0.0
        %1898 = vmatprep.subr.mxu0 0.0
        %1899 = vmatpush1.msra.mxu0 0.0
        %1900 = vmatprep.subr.mxu0 0.0
        %1901 = vmatpush1.msra.mxu0 0.0
        %1902 = vmatprep.subr.mxu0 0.0
        %1903 = vmatpush1.msra.mxu0 0.0
        %1904 = vmatprep.subr.mxu0 0.0
        %1905 = vmatpush1.msra.mxu0 0.0
        %1906 = vmatprep.subr.mxu0 0.0
        %1907 = vmatpush1.msra.mxu0 0.0
        %1908 = vmatprep.subr.mxu0 0.0
        %1909 = vmatpush1.msra.mxu0 0.0
        %1910 = vmatprep.subr.mxu0 0.0
        %1911 = vmatpush1.msra.mxu0 0.0
        %1912 = vmatprep.subr.mxu0 0.0
        %1913 = vmatpush1.msra.mxu0 0.0
        %1914 = vmatprep.subr.mxu0 0.0
        %1915 = vmatpush1.msra.mxu0 0.0
        %1916 = vmatprep.subr.mxu0 0.0
        %1917 = vmatpush1.msra.mxu0 0.0
        %1918 = vmatprep.subr.mxu0 0.0
        %1919 = vmatpush1.msra.mxu0 0.0
        %1920 = vmatprep.subr.mxu0 0.0
        %1921 = vmatpush1.msra.mxu0 0.0
        %1922 = vmatprep.subr.mxu0 0.0
        %1923 = vmatpush1.msra.mxu0 0.0
        %1924 = vmatprep.subr.mxu0 0.0
        %1925 = vmatpush1.msra.mxu0 0.0
        %1926 = vmatprep.subr.mxu0 0.0
        %1927 = vmatpush1.msra.mxu0 0.0
        %1928 = vmatprep.subr.mxu0 0.0
        %1929 = vmatpush1.msra.mxu0 0.0
        %1930 = vmatprep.subr.mxu0 0.0
        %1931 = vmatpush1.msra.mxu0 0.0
        %1932 = vmatprep.subr.mxu0 0.0
        %1933 = vmatpush1.msra.mxu0 0.0
        %1934 = vmatprep.subr.mxu0 0.0
        %1935 = vmatpush1.msra.mxu0 0.0
        %1936 = vmatprep.subr.mxu0 0.0
        %1937 = vmatpush1.msra.mxu0 0.0
        %1938 = vmatprep.subr.mxu0 0.0
        %1939 = vmatpush1.msra.mxu0 0.0
        %1940 = vmatprep.subr.mxu0 0.0
        %1941 = vmatpush1.msra.mxu0 0.0
        %1942 = vmatprep.subr.mxu0 0.0
        %1943 = vmatpush1.msra.mxu0 0.0
        %1944 = vmatprep.subr.mxu0 0.0
        %1945 = vmatpush1.msra.mxu0 0.0
        %1946 = vmatprep.subr.mxu0 0.0
        %1947 = vmatpush1.msra.mxu0 0.0
        %1948 = vmatprep.subr.mxu0 0.0
        %1949 = vmatpush1.msra.mxu0 0.0
        %1950 = vmatprep.subr.mxu0 0.0
        %1951 = vmatpush1.msra.mxu0 0.0
        %1952 = vmatprep.mubr.f32.mxu0 0.0
        %1953 = vmatmul.mubr.f32.gmra.mrb[0].mxu0 %v1886
        %v1954 = vpop.f32.mrb[0].mxu0
        %v1955 = vadd.f32 0.0, %v1954
        %v1956 = vpop.f32.mrb[0].mxu0
        %1957 = vdwg.mxu0
        %v1958 = vadd.f32 %v1717, %v1955
        %v1959 = vld [vmem:[#allocation14] sm:$0x1]
        %v1961 = vlaneseq
        %v1962 = vshrl.u32 %v1961, 7
        %v1963 = vsub.s32 0, %v1962
        %v1964 = vrot.slane %v1959, %v1963
        %v1966 = vadd.f32 %v1958, %v1964
        %v1967 = vadd.f32 %v1966, %v744
        %v1968 = vmul.f32 %v1967, %v1967
        %v1969 = vsel %vm758, %v1968, 0.0
        %1970 = vadd.xlane.f32.xlu0 %v1969
        %v1971 = vpop.xlane.xlu0 %1970
        %v1972 = vrsqrt.pop %v1971
        %v1973 = vmul.f32 %v1971, %v1972
        %vm1974 = vcmp.eq.f32.partialorder %v1971, inf
        %v1975 = vsel %vm1974, %v1971, %v1973
        %vm1976 = vcmp.eq.f32.partialorder %v1971, 0.0
        %v1977 = vand.u32 %v1971, 2147483648
        %v1978 = vsel %vm1976, %v1977, %v1975
        %v1979 = vmul.f32 %v1978, 0.17677669
        %v1980 = vld [vmem:[#allocation16] sm:$0x1]
        %v1981 = vadd.f32 %v1979, 1e-08
        %v1982 = vrcp.pop %v1981
        %v1983 = vmul.f32 %v1967, %v1982
        %v1985 = vlaneseq
        %v1986 = vshrl.u32 %v1985, 7
        %v1987 = vsub.s32 0, %v1986
        %v1988 = vrot.slane %v1980, %v1987
        %v1990 = vmul.f32 %v1988, %v1983
        %v1991 = vld [vmem:[%s12] sm:$0xff]
        %v1992 = vld [vmem:[%s12 + $0x8] sm:$0xff]
        %v1993 = vld [vmem:[%s12 + $0x10] sm:$0xff]
        %v1994 = vld [vmem:[%s12 + $0x18] sm:$0xff]
        %v1995 = vld [vmem:[#allocation17] sm:$0x1]
        %v1997 = vlaneseq
        %v1998 = vshrl.u32 %v1997, 7
        %v1999 = vsub.s32 0, %v1998
        %v2000 = vrot.slane %v1995, %v1999
        %v2003 = vsel %vm758, %v1990, 0
        %2005 = vmatprep.subr.mxu0 0.0
        %2006 = vmatpush1.msra.mxu0 %v1991
        %2007 = vmatprep.subr.mxu0 0.0
        %2008 = vmatpush1.msra.mxu0 %v1992
        %2009 = vmatprep.subr.mxu0 0.0
        %2010 = vmatpush1.msra.mxu0 %v1993
        %2011 = vmatprep.subr.mxu0 0.0
        %2012 = vmatpush1.msra.mxu0 %v1994
        %2013 = vmatprep.subr.mxu0 0.0
        %2014 = vmatpush1.msra.mxu0 0.0
        %2015 = vmatprep.subr.mxu0 0.0
        %2016 = vmatpush1.msra.mxu0 0.0
        %2017 = vmatprep.subr.mxu0 0.0
        %2018 = vmatpush1.msra.mxu0 0.0
        %2019 = vmatprep.subr.mxu0 0.0
        %2020 = vmatpush1.msra.mxu0 0.0
        %2021 = vmatprep.subr.mxu0 0.0
        %2022 = vmatpush1.msra.mxu0 0.0
        %2023 = vmatprep.subr.mxu0 0.0
        %2024 = vmatpush1.msra.mxu0 0.0
        %2025 = vmatprep.subr.mxu0 0.0
        %2026 = vmatpush1.msra.mxu0 0.0
        %2027 = vmatprep.subr.mxu0 0.0
        %2028 = vmatpush1.msra.mxu0 0.0
        %2029 = vmatprep.subr.mxu0 0.0
        %2030 = vmatpush1.msra.mxu0 0.0
        %2031 = vmatprep.subr.mxu0 0.0
        %2032 = vmatpush1.msra.mxu0 0.0
        %2033 = vmatprep.subr.mxu0 0.0
        %2034 = vmatpush1.msra.mxu0 0.0
        %2035 = vmatprep.subr.mxu0 0.0
        %2036 = vmatpush1.msra.mxu0 0.0
        %2037 = vmatprep.subr.mxu0 0.0
        %2038 = vmatpush1.msra.mxu0 0.0
        %2039 = vmatprep.subr.mxu0 0.0
        %2040 = vmatpush1.msra.mxu0 0.0
        %2041 = vmatprep.subr.mxu0 0.0
        %2042 = vmatpush1.msra.mxu0 0.0
        %2043 = vmatprep.subr.mxu0 0.0
        %2044 = vmatpush1.msra.mxu0 0.0
        %2045 = vmatprep.subr.mxu0 0.0
        %2046 = vmatpush1.msra.mxu0 0.0
        %2047 = vmatprep.subr.mxu0 0.0
        %2048 = vmatpush1.msra.mxu0 0.0
        %2049 = vmatprep.subr.mxu0 0.0
        %2050 = vmatpush1.msra.mxu0 0.0
        %2051 = vmatprep.subr.mxu0 0.0
        %2052 = vmatpush1.msra.mxu0 0.0
        %2053 = vmatprep.subr.mxu0 0.0
        %2054 = vmatpush1.msra.mxu0 0.0
        %2055 = vmatprep.subr.mxu0 0.0
        %2056 = vmatpush1.msra.mxu0 0.0
        %2057 = vmatprep.subr.mxu0 0.0
        %2058 = vmatpush1.msra.mxu0 0.0
        %2059 = vmatprep.subr.mxu0 0.0
        %2060 = vmatpush1.msra.mxu0 0.0
        %2061 = vmatprep.subr.mxu0 0.0
        %2062 = vmatpush1.msra.mxu0 0.0
        %2063 = vmatprep.subr.mxu0 0.0
        %2064 = vmatpush1.msra.mxu0 0.0
        %2065 = vmatprep.subr.mxu0 0.0
        %2066 = vmatpush1.msra.mxu0 0.0
        %2067 = vmatprep.subr.mxu0 0.0
        %2068 = vmatpush1.msra.mxu0 0.0
        %2069 = vmatprep.mubr.f32.mxu0 0.0
        %2070 = vmatmul.mubr.f32.gmra.mrb[0].mxu0 %v2003
        %v2071 = vpop.f32.mrb[0].mxu0
        %v2072 = vadd.f32 %v2000, %v2071
        %v2073 = vpop.f32.mrb[0].mxu0
        %2074 = vdwg.mxu0
        %v2075 = vmax.f32 %v2072, 0.0
        %v2076 = vld [vmem:[%s14] sm:$0xff]
        %v2077 = vld [vmem:[%s14 + $0x8] sm:$0xff]
        %v2078 = vld [vmem:[%s15] sm:$0x1]
        %v2080 = vlaneseq
        %v2081 = vshrl.u32 %v2080, 7
        %v2082 = vsub.s32 0, %v2081
        %v2083 = vrot.slane %v2078, %v2082
        %vm2085 = vcmask 130048
        %v2087 = vsel %vm2085, %v2075, 0
        %2089 = vmatprep.subr.mxu0 0.0
        %2090 = vmatpush1.msra.mxu0 %v2076
        %2091 = vmatprep.subr.mxu0 0.0
        %2092 = vmatpush1.msra.mxu0 %v2077
        %2093 = vmatprep.subr.mxu0 0.0
        %2094 = vmatpush1.msra.mxu0 0.0
        %2095 = vmatprep.subr.mxu0 0.0
        %2096 = vmatpush1.msra.mxu0 0.0
        %2097 = vmatprep.subr.mxu0 0.0
        %2098 = vmatpush1.msra.mxu0 0.0
        %2099 = vmatprep.subr.mxu0 0.0
        %2100 = vmatpush1.msra.mxu0 0.0
        %2101 = vmatprep.subr.mxu0 0.0
        %2102 = vmatpush1.msra.mxu0 0.0
        %2103 = vmatprep.subr.mxu0 0.0
        %2104 = vmatpush1.msra.mxu0 0.0
        %2105 = vmatprep.subr.mxu0 0.0
        %2106 = vmatpush1.msra.mxu0 0.0
        %2107 = vmatprep.subr.mxu0 0.0
        %2108 = vmatpush1.msra.mxu0 0.0
        %2109 = vmatprep.subr.mxu0 0.0
        %2110 = vmatpush1.msra.mxu0 0.0
        %2111 = vmatprep.subr.mxu0 0.0
        %2112 = vmatpush1.msra.mxu0 0.0
        %2113 = vmatprep.subr.mxu0 0.0
        %2114 = vmatpush1.msra.mxu0 0.0
        %2115 = vmatprep.subr.mxu0 0.0
        %2116 = vmatpush1.msra.mxu0 0.0
        %2117 = vmatprep.subr.mxu0 0.0
        %2118 = vmatpush1.msra.mxu0 0.0
        %2119 = vmatprep.subr.mxu0 0.0
        %2120 = vmatpush1.msra.mxu0 0.0
        %2121 = vmatprep.subr.mxu0 0.0
        %2122 = vmatpush1.msra.mxu0 0.0
        %2123 = vmatprep.subr.mxu0 0.0
        %2124 = vmatpush1.msra.mxu0 0.0
        %2125 = vmatprep.subr.mxu0 0.0
        %2126 = vmatpush1.msra.mxu0 0.0
        %2127 = vmatprep.subr.mxu0 0.0
        %2128 = vmatpush1.msra.mxu0 0.0
        %2129 = vmatprep.subr.mxu0 0.0
        %2130 = vmatpush1.msra.mxu0 0.0
        %2131 = vmatprep.subr.mxu0 0.0
        %2132 = vmatpush1.msra.mxu0 0.0
        %2133 = vmatprep.subr.mxu0 0.0
        %2134 = vmatpush1.msra.mxu0 0.0
        %2135 = vmatprep.subr.mxu0 0.0
        %2136 = vmatpush1.msra.mxu0 0.0
        %2137 = vmatprep.subr.mxu0 0.0
        %2138 = vmatpush1.msra.mxu0 0.0
        %2139 = vmatprep.subr.mxu0 0.0
        %2140 = vmatpush1.msra.mxu0 0.0
        %2141 = vmatprep.subr.mxu0 0.0
        %2142 = vmatpush1.msra.mxu0 0.0
        %2143 = vmatprep.subr.mxu0 0.0
        %2144 = vmatpush1.msra.mxu0 0.0
        %2145 = vmatprep.subr.mxu0 0.0
        %2146 = vmatpush1.msra.mxu0 0.0
        %2147 = vmatprep.subr.mxu0 0.0
        %2148 = vmatpush1.msra.mxu0 0.0
        %2149 = vmatprep.subr.mxu0 0.0
        %2150 = vmatpush1.msra.mxu0 0.0
        %2151 = vmatprep.subr.mxu0 0.0
        %2152 = vmatpush1.msra.mxu0 0.0
        %2153 = vmatprep.mubr.f32.mxu0 0.0
        %2154 = vmatmul.mubr.f32.gmra.mrb[0].mxu0 %v2087
        %v2155 = vpop.f32.mrb[0].mxu0
        %v2156 = vadd.f32 %v2083, %v2155
        %v2157 = vpop.f32.mrb[0].mxu0
        %2158 = vdwg.mxu0
        %v2159 = vadd.f32 %v1990, %v2156
        %v2160 = vmul.f32 %v2159, %v2159
        %v2161 = vsel %vm758, %v2160, 0.0
        %2162 = vadd.xlane.f32.xlu0 %v2161
        %v2163 = vpop.xlane.xlu0 %2162
        %v2164 = vrsqrt.pop %v2163
        %v2165 = vmul.f32 %v2163, %v2164
        %vm2166 = vcmp.eq.f32.partialorder %v2163, inf
        %v2167 = vsel %vm2166, %v2163, %v2165
        %vm2168 = vcmp.eq.f32.partialorder %v2163, 0.0
        %v2169 = vand.u32 %v2163, 2147483648
        %v2170 = vsel %vm2168, %v2169, %v2167
        %v2171 = vmul.f32 %v2170, 0.17677669
        %v2172 = vld [vmem:[%s16] sm:$0x1]
        %v2173 = vadd.f32 %v2171, 1e-08
        %v2174 = vrcp.pop %v2173
        %v2175 = vmul.f32 %v2159, %v2174
        %v2177 = vlaneseq
        %v2178 = vshrl.u32 %v2177, 7
        %v2179 = vsub.s32 0, %v2178
        %v2180 = vrot.slane %v2172, %v2179
        %v2182 = vmul.f32 %v2180, %v2175
        %2183 = vst.msk [vmem:[%s743] sm:$0xff] %vm758, %v2182
        %s2184 = sand.u32 %s437, 1
        %s2185 = scalar_lea.sflag [#allocation4], %s2184
        %s2186 = sand.u32 %s437, 1
        %s2187 = smul.addr %s2186, 8
        %s2188 = scalar_lea.vmem [#allocation19], %s2187
        // Predicated region
        $region129: #{tpu_custom_call.1} parent=87 // pred_check
          %p2189 = pneg %p447
        $region130: #{tpu_custom_call.1} parent=87 // pred_check_branch
          %2191 = sbr.rel (%p2189) target = $region132
        $region131: #{tpu_custom_call.1} parent=87 // pred_region
          %s2193 = ssub.s32 128, 128
          %2194 = vsyncadd %s2185, %s2193
          %s2195 = sadd.s32 %s46, %s45
          %s2196 = smul.addr %s2195, 128
          %s2197 = scalar_lea.hbm %s17, %s2196
          %s2199 = sshll.u32 %s2188, 4
          %s2200 = int_to_ptr.vmem [resolvable:$true] %s2199
          %2202 = dma.vmem_to_hbm [thread:$0]  %s2200, 128, %s2197, %s2185
        $region132: #{tpu_custom_call.1} parent=87 // pred_fallthru
          _
      $region88: #{tpu_custom_call.1} parent=5 // pred_fallthru
        _
      %p2203 = scmp.le.s32.totalorder 2, %s36
      // Predicated region
      $region133: #{tpu_custom_call.1} parent=5 // pred_check
        %p2204 = pneg %p2203
      $region134: #{tpu_custom_call.1} parent=5 // pred_check_branch
        %2206 = sbr.rel (%p2204) target = $region136
      $region135: #{tpu_custom_call.1} parent=5 // pred_region
        %s2207 = ssub.s32 %s36, 2
        // Predicated region
        $region137: #{tpu_custom_call.1} parent=135 // pred_check
          %p2208 = pneg %p453
        $region138: #{tpu_custom_call.1} parent=135 // pred_check_branch
          %2210 = sbr.rel (%p2208) target = $region140
        $region139: #{tpu_custom_call.1} parent=135 // pred_region
          %s2211 = sand.u32 %s438, 1
          %s2212 = scalar_lea.sflag [#allocation4], %s2211
          %s2213 = sand.u32 %s438, 1
          %s2214 = smul.addr %s2213, 8
          %s2215 = scalar_lea.vmem [#allocation19], %s2214
          %2216 = dma.done %s2212, 128
        $region140: #{tpu_custom_call.1} parent=135 // pred_fallthru
          _
      $region136: #{tpu_custom_call.1} parent=5 // pred_fallthru
        _
    $region6: #{tpu_custom_call.1} parent=1 // loop_footer
      %s40 = sadd.s32 1, %s36
    $region7: #{tpu_custom_call.1} parent=1 // loop_footer_branch
      %35 = sbr.rel target = $region3
    $region8: #{tpu_custom_call.1} parent=1 // loop_exit
      _
    %2217 = vsyncpa [#allocation3], 1
    %s2218 = scalar_lea.sflag [#allocation3], 1
    %2219 = vsyncpa %s2218, 1
    %2220 = vsyncpa [#allocation6], 1
    %s2221 = scalar_lea.sflag [#allocation6], 1
    %2222 = vsyncpa %s2221, 1
    %2223 = vsyncpa [#allocation9], 1
    %2224 = vsyncpa [#allocation12], 1
    %2225 = vsyncpa [#allocation15], 1
    %2226 = vsyncpa [#allocation18], 1
    %2227 = vsyncpa [#allocation4], 1
    %s2228 = scalar_lea.sflag [#allocation4], 1
    %2229 = vsyncpa %s2228, 1

</llo_original>
